<compile_context>
chip_gen: v5e
topology: v5e:2x2
jax: 0.10.0
libtpu: 0.0.40
codegen_flags: <defaults>
</compile_context>

<pallas_src>
import functools
import math

import jax
import jax.numpy as jnp
import numpy as np
from jax.experimental import pallas as pl
from jax.experimental.pallas import tpu as pltpu

_INV_SQRT2 = 1.0 / math.sqrt(2.0)


def _layernorm(z, w, b, eps=1e-5):
    # z: (L, C) f32, w/b: (1, C) f32
    mu = jnp.mean(z, axis=-1, keepdims=True)
    var = jnp.mean((z - mu) ** 2, axis=-1, keepdims=True)
    return (z - mu) * jax.lax.rsqrt(var + eps) * w + b


def residual_block_kernel(x_ref,
                          ln1_w_ref, ln1_b_ref,
                          wqkv_ref, bqkv_ref,
                          wo_ref, bo_ref,
                          ln2_w_ref, ln2_b_ref,
                          wfc_ref, bfc_ref,
                          wproj_ref, bproj_ref,
                          o_ref,
                          x1_sc, h2_sc, acc_sc,
                          *, num_heads, head_dim):
    C = num_heads * head_dim
    L = x_ref.shape[1]
    j = pl.program_id(1)

    # ---- chunk 0 only: ln_1 -> MHSA -> +residual, then ln_2; init MLP acc ----
    @pl.when(j == 0)
    def _attention_and_init():
        x = x_ref[0].astype(jnp.float32)                                   # (L, C)
        h = _layernorm(x, ln1_w_ref[...], ln1_b_ref[...]).astype(jnp.bfloat16)
        qkv = jnp.dot(h, wqkv_ref[...],
                      preferred_element_type=jnp.float32) + bqkv_ref[...]  # (L, 3C) f32
        # Q already carries the head_dim**-0.5 scale (folded into wqkv/bqkv).
        attn = jnp.zeros((L, C), jnp.float32) + bo_ref[...]
        for hd in range(num_heads):                   # static unroll over heads
            lo, hi = hd * head_dim, (hd + 1) * head_dim
            qh = qkv[:, lo:hi].astype(jnp.bfloat16)                        # (L, D)
            kt = qkv[:, C + lo:C + hi].T.astype(jnp.bfloat16)              # (D, L)
            vh = qkv[:, 2 * C + lo:2 * C + hi].astype(jnp.bfloat16)        # (L, D)
            s = jnp.dot(qh, kt, preferred_element_type=jnp.float32)        # (L, L)
            s = s - jnp.max(s, axis=-1, keepdims=True)
            p = jnp.exp(s)
            p = p * pl.reciprocal(jnp.sum(p, axis=-1, keepdims=True), approx=True)
            oh = jnp.dot(p.astype(jnp.bfloat16), vh,
                         preferred_element_type=jnp.float32)               # (L, D)
            # per-head slice of out_proj: no concat, no (L, C) attn intermediate
            attn = attn + jnp.dot(oh.astype(jnp.bfloat16), wo_ref[lo:hi, :],
                                  preferred_element_type=jnp.float32)
        x1 = x + attn
        x1_sc[...] = x1
        h2_sc[...] = _layernorm(x1, ln2_w_ref[...], ln2_b_ref[...]).astype(jnp.bfloat16)
        acc_sc[...] = jnp.zeros(acc_sc.shape, acc_sc.dtype)

    # ---- every chunk: c_fc chunk -> exact GELU -> partial c_proj, accumulate --
    m = jnp.dot(h2_sc[...], wfc_ref[...],
                preferred_element_type=jnp.float32) + bfc_ref[...]         # (L, MT)
    m = 0.5 * m * (1.0 + jax.lax.erf(m * _INV_SQRT2))                      # exact GELU
    acc_sc[...] += jnp.dot(m.astype(jnp.bfloat16), wproj_ref[...],
                           preferred_element_type=jnp.float32)             # (L, C)

    # ---- last chunk: residual + c_proj bias, write out ------------------------
    @pl.when(j == pl.num_programs(1) - 1)
    def _finalize():
        o_ref[0] = (x1_sc[...] + acc_sc[...] + bproj_ref[...]).astype(o_ref.dtype)


def residual_attention_block(x_lnc, params, num_heads, mlp_chunk=512):
    """x_lnc: (L, N, C), exactly as the PyTorch module consumes it."""
    L, N, C = x_lnc.shape
    head_dim = C // num_heads
    M = params["fc_w"].shape[0]

    if M % mlp_chunk != 0 or (mlp_chunk % 128 != 0 and mlp_chunk != M):
        mlp_chunk = M                                  # fallback: single chunk
    MT = min(mlp_chunk, M)
    n_chunks = M // MT

    f32, bf16 = jnp.float32, jnp.bfloat16
    scale = head_dim ** -0.5

    # Fold the attention scale into the Q third of the in-projection (W and b).
    q_scale = jnp.concatenate([jnp.full((C,), scale, f32), jnp.ones((2 * C,), f32)])
    in_w = params["in_proj_w"].astype(f32) * q_scale[:, None]              # (3C, C)
    in_b = params["in_proj_b"].astype(f32) * q_scale                       # (3C,)

    weights = [
        params["ln1_w"].reshape(1, C).astype(f32),
        params["ln1_b"].reshape(1, C).astype(f32),
        in_w.T.astype(bf16),                           # wqkv  (C, 3C) bf16
        in_b.reshape(1, 3 * C),                        # bqkv  (1, 3C) f32
        params["out_proj_w"].T.astype(bf16),           # wo    (C, C)  bf16
        params["out_proj_b"].reshape(1, C).astype(f32),
        params["ln2_w"].reshape(1, C).astype(f32),
        params["ln2_b"].reshape(1, C).astype(f32),
        params["fc_w"].T.astype(bf16),                 # wfc   (C, M)  bf16
        params["fc_b"].reshape(1, M).astype(f32),
        params["proj_w"].T.astype(bf16),               # wproj (M, C)  bf16
        params["proj_b"].reshape(1, C).astype(f32),
    ]

    def const_spec(*shape):
        nd = len(shape)
        return pl.BlockSpec(shape, lambda n, j, _nd=nd: (0,) * _nd)

    in_specs = [
        pl.BlockSpec((1, L, C), lambda n, j: (n, 0, 0)),     # x, one batch element
        const_spec(1, C), const_spec(1, C),                  # ln_1
        const_spec(C, 3 * C), const_spec(1, 3 * C),          # in-projection
        const_spec(C, C), const_spec(1, C),                  # out-projection
        const_spec(1, C), const_spec(1, C),                  # ln_2
        pl.BlockSpec((C, MT), lambda n, j: (0, j)),          # c_fc weight chunk
        pl.BlockSpec((1, MT), lambda n, j: (0, j)),          # c_fc bias chunk
        pl.BlockSpec((MT, C), lambda n, j: (j, 0)),          # c_proj weight chunk
        const_spec(1, C),                                    # c_proj bias
    ]

    x = jnp.transpose(x_lnc, (1, 0, 2))                      # (N, L, C) for the kernel

    out = pl.pallas_call(
        functools.partial(residual_block_kernel,
                          num_heads=num_heads, head_dim=head_dim),
        out_shape=jax.ShapeDtypeStruct((N, L, C), x.dtype),
        grid=(N, n_chunks),
        in_specs=in_specs,
        out_specs=pl.BlockSpec((1, L, C), lambda n, j: (n, 0, 0)),
        scratch_shapes=[
            pltpu.VMEM((L, C), jnp.float32),    # x1  = x + attn (residual carry)
            pltpu.VMEM((L, C), jnp.bfloat16),   # h2  = ln_2(x1), bf16 matmul operand
            pltpu.VMEM((L, C), jnp.float32),    # MLP partial-product accumulator
        ],
        compiler_params=pltpu.CompilerParams(
            dimension_semantics=("parallel", "arbitrary"),
            vmem_limit_bytes=48 * 1024 * 1024),
    )(x, *weights)

    return jnp.transpose(out, (1, 0, 2))                     # back to (L, N, C)


def reference(x_lnc, params, num_heads):
    """Pure-JAX (f32) reimplementation of the PyTorch forward, for verification."""
    L, N, C = x_lnc.shape
    D = C // num_heads

    def ln(z, w, b, eps=1e-5):
        mu = jnp.mean(z, axis=-1, keepdims=True)
        var = jnp.mean((z - mu) ** 2, axis=-1, keepdims=True)
        return (z - mu) / jnp.sqrt(var + eps) * w + b

    h = ln(x_lnc, params["ln1_w"], params["ln1_b"])
    qkv = h @ params["in_proj_w"].T + params["in_proj_b"]
    q, k, v = jnp.split(qkv, 3, axis=-1)
    q = q.reshape(L, N * num_heads, D).transpose(1, 0, 2) * (D ** -0.5)
    k = k.reshape(L, N * num_heads, D).transpose(1, 0, 2)
    v = v.reshape(L, N * num_heads, D).transpose(1, 0, 2)
    attn = jax.nn.softmax(jnp.einsum("bqd,bkd->bqk", q, k), axis=-1)
    o = jnp.einsum("bqk,bkd->bqd", attn, v).transpose(1, 0, 2).reshape(L, N, C)
    o = o @ params["out_proj_w"].T + params["out_proj_b"]
    x1 = x_lnc + o
    h2 = ln(x1, params["ln2_w"], params["ln2_b"])
    m = h2 @ params["fc_w"].T + params["fc_b"]
    m = jax.nn.gelu(m, approximate=False)
    m = m @ params["proj_w"].T + params["proj_b"]
    return x1 + m


if __name__ == "__main__":
    L, N, C, H = 16, 2, 128, 4                    # seq, batch, d_model, heads
    MLP = int(C * 4.0)                            # 512

    key = jax.random.PRNGKey(0)
    ks = jax.random.split(key, 8)
    params = {
        "ln1_w": 1.0 + 0.1 * jax.random.normal(ks[6], (C,), jnp.float32),
        "ln1_b": 0.1 * jax.random.normal(ks[7], (C,), jnp.float32),
        "in_proj_w": jax.random.normal(ks[0], (3 * C, C), jnp.float32) * (C ** -0.5),
        "in_proj_b": jax.random.normal(ks[1], (3 * C,), jnp.float32) * 0.02,
        "out_proj_w": jax.random.normal(ks[2], (C, C), jnp.float32) * (C ** -0.5),
        "out_proj_b": jnp.zeros((C,), jnp.float32),
        "ln2_w": jnp.ones((C,), jnp.float32),
        "ln2_b": jnp.zeros((C,), jnp.float32),
        "fc_w": jax.random.normal(ks[3], (MLP, C), jnp.float32) * (C ** -0.5),
        "fc_b": jnp.zeros((MLP,), jnp.float32),
        "proj_w": jax.random.normal(ks[4], (C, MLP), jnp.float32) * (MLP ** -0.5),
        "proj_b": jnp.zeros((C,), jnp.float32),
    }
    x = jax.random.normal(ks[5], (L, N, C), jnp.float32)      # (L, N, C) as in PyTorch

    out = residual_attention_block(x, params, num_heads=H, mlp_chunk=256)  # 2 MLP chunks
    out = jax.block_until_ready(out)

    ref = reference(x, params, H)
    assert out.shape == (L, N, C)

    out_np, ref_np = np.asarray(out), np.asarray(ref)
    # bf16 matmul operands (f32 accumulation) -> looser tolerance than a pure-f32 kernel.
    rel_fro = np.linalg.norm(out_np - ref_np) / np.linalg.norm(ref_np)
    assert rel_fro < 3e-2, f"relative Frobenius error too large: {rel_fro}"
    np.testing.assert_allclose(out_np, ref_np, atol=1e-1, rtol=1e-1)
    print("KERNEL_OK")
</pallas_src>

<mosaic_0001>
module attributes {stable_mosaic.version = 11 : i64} {
  func.func @residual_block_kernel(%arg0: i32, %arg1: i32, %arg2: memref<1x16x128xf32, #tpu.memory_space<vmem>>, %arg3: memref<1x128xf32, #tpu.memory_space<vmem>>, %arg4: memref<1x128xf32, #tpu.memory_space<vmem>>, %arg5: memref<128x384xbf16, #tpu.memory_space<vmem>>, %arg6: memref<1x384xf32, #tpu.memory_space<vmem>>, %arg7: memref<128x128xbf16, #tpu.memory_space<vmem>>, %arg8: memref<1x128xf32, #tpu.memory_space<vmem>>, %arg9: memref<1x128xf32, #tpu.memory_space<vmem>>, %arg10: memref<1x128xf32, #tpu.memory_space<vmem>>, %arg11: memref<128x256xbf16, #tpu.memory_space<vmem>>, %arg12: memref<1x256xf32, #tpu.memory_space<vmem>>, %arg13: memref<256x128xbf16, #tpu.memory_space<vmem>>, %arg14: memref<1x128xf32, #tpu.memory_space<vmem>>, %arg15: memref<1x16x128xf32, #tpu.memory_space<vmem>>, %arg16: memref<16x128xf32, #tpu.memory_space<vmem>>, %arg17: memref<16x128xbf16, #tpu.memory_space<vmem>>, %arg18: memref<16x128xf32, #tpu.memory_space<vmem>>) attributes {dimension_semantics = [#tpu.dimension_semantics<parallel>, #tpu.dimension_semantics<arbitrary>], iteration_bounds = array<i64: 2, 2>, scalar_prefetch = 0 : i64, scratch_operands = 3 : i64, tpu.core_type = #tpu.core_type<tc>, window_params = [{transform_indices = @transform_0, window_bounds = array<i64: 1, 16, 128>}, {pipeline_mode = #tpu.pipeline_mode<synchronous>, transform_indices = @transform_1, window_bounds = array<i64: 1, 128>}, {pipeline_mode = #tpu.pipeline_mode<synchronous>, transform_indices = @transform_2, window_bounds = array<i64: 1, 128>}, {pipeline_mode = #tpu.pipeline_mode<synchronous>, transform_indices = @transform_3, window_bounds = array<i64: 128, 384>}, {pipeline_mode = #tpu.pipeline_mode<synchronous>, transform_indices = @transform_4, window_bounds = array<i64: 1, 384>}, {pipeline_mode = #tpu.pipeline_mode<synchronous>, transform_indices = @transform_5, window_bounds = array<i64: 128, 128>}, {pipeline_mode = #tpu.pipeline_mode<synchronous>, transform_indices = @transform_6, window_bounds = array<i64: 1, 128>}, {pipeline_mode = #tpu.pipeline_mode<synchronous>, transform_indices = @transform_7, window_bounds = array<i64: 1, 128>}, {pipeline_mode = #tpu.pipeline_mode<synchronous>, transform_indices = @transform_8, window_bounds = array<i64: 1, 128>}, {transform_indices = @transform_9, window_bounds = array<i64: 128, 256>}, {transform_indices = @transform_10, window_bounds = array<i64: 1, 256>}, {transform_indices = @transform_11, window_bounds = array<i64: 256, 128>}, {pipeline_mode = #tpu.pipeline_mode<synchronous>, transform_indices = @transform_12, window_bounds = array<i64: 1, 128>}, {transform_indices = @transform_13, window_bounds = array<i64: 1, 16, 128>}]} {
    %c0_i32 = arith.constant 0 : i32
    %0 = arith.cmpi eq, %arg1, %c0_i32 : i32
    %1 = arith.extui %0 : i1 to i32
    %c0_i32_0 = arith.constant 0 : i32
    %2 = arith.cmpi ne, %1, %c0_i32_0 : i32
    scf.if %2 {
      %c0_17 = arith.constant 0 : index
      %c0_18 = arith.constant 0 : index
      %c0_19 = arith.constant 0 : index
      %26 = vector.load %arg2[%c0_17, %c0_18, %c0_19] : memref<1x16x128xf32, #tpu.memory_space<vmem>>, vector<1x16x128xf32>
      %27 = vector.shape_cast %26 : vector<1x16x128xf32> to vector<16x128xf32>
      %c0_20 = arith.constant 0 : index
      %c0_21 = arith.constant 0 : index
      %28 = vector.load %arg3[%c0_20, %c0_21] : memref<1x128xf32, #tpu.memory_space<vmem>>, vector<1x128xf32>
      %c0_22 = arith.constant 0 : index
      %c0_23 = arith.constant 0 : index
      %29 = vector.load %arg4[%c0_22, %c0_23] : memref<1x128xf32, #tpu.memory_space<vmem>>, vector<1x128xf32>
      %cst_24 = arith.constant dense<0.000000e+00> : vector<16xf32>
      %30 = vector.multi_reduction <add>, %27, %cst_24 [1] : vector<16x128xf32> to vector<16xf32>
      %31 = vector.shape_cast %30 : vector<16xf32> to vector<16x1xf32>
      %cst_25 = arith.constant 1.280000e+02 : f32
      %32 = vector.broadcast %cst_25 : f32 to vector<16x1xf32>
      %33 = arith.divf %31, %32 : vector<16x1xf32>
      %34 = vector.broadcast %33 : vector<16x1xf32> to vector<16x128xf32>
      %35 = arith.subf %27, %34 : vector<16x128xf32>
      %36 = arith.mulf %35, %35 : vector<16x128xf32>
      %cst_26 = arith.constant dense<0.000000e+00> : vector<16xf32>
      %37 = vector.multi_reduction <add>, %36, %cst_26 [1] : vector<16x128xf32> to vector<16xf32>
      %38 = vector.shape_cast %37 : vector<16xf32> to vector<16x1xf32>
      %cst_27 = arith.constant 1.280000e+02 : f32
      %39 = vector.broadcast %cst_27 : f32 to vector<16x1xf32>
      %40 = arith.divf %38, %39 : vector<16x1xf32>
      %41 = vector.broadcast %33 : vector<16x1xf32> to vector<16x128xf32>
      %42 = arith.subf %27, %41 : vector<16x128xf32>
      %cst_28 = arith.constant 9.99999974E-6 : f32
      %43 = vector.broadcast %cst_28 : f32 to vector<16x1xf32>
      %44 = arith.addf %40, %43 : vector<16x1xf32>
      %45 = math.rsqrt %44 : vector<16x1xf32>
      %46 = vector.broadcast %45 : vector<16x1xf32> to vector<16x128xf32>
      %47 = arith.mulf %42, %46 : vector<16x128xf32>
      %48 = vector.broadcast %28 : vector<1x128xf32> to vector<16x128xf32>
      %49 = arith.mulf %47, %48 : vector<16x128xf32>
      %50 = vector.broadcast %29 : vector<1x128xf32> to vector<16x128xf32>
      %51 = arith.addf %49, %50 : vector<16x128xf32>
      %52 = arith.truncf %51 : vector<16x128xf32> to vector<16x128xbf16>
      %c0_29 = arith.constant 0 : index
      %c0_30 = arith.constant 0 : index
      %53 = vector.load %arg5[%c0_29, %c0_30] : memref<128x384xbf16, #tpu.memory_space<vmem>>, vector<128x384xbf16>
      %cst_31 = arith.constant dense<0.000000e+00> : vector<16x384xf32>
      %54 = tpu.matmul %52, %53, %cst_31 {dimension_numbers = #tpu.dot_dimension_numbers<[1], [0], [0], [1], [0, 0, 1, 1], [], []>} : vector<16x128xbf16>, vector<128x384xbf16>, vector<16x384xf32> -> vector<16x384xf32>
      %c0_32 = arith.constant 0 : index
      %c0_33 = arith.constant 0 : index
      %55 = vector.load %arg6[%c0_32, %c0_33] : memref<1x384xf32, #tpu.memory_space<vmem>>, vector<1x384xf32>
      %56 = vector.broadcast %55 : vector<1x384xf32> to vector<16x384xf32>
      %57 = arith.addf %54, %56 : vector<16x384xf32>
      %cst_34 = arith.constant 0.000000e+00 : f32
      %58 = vector.broadcast %cst_34 : f32 to vector<16x128xf32>
      %c0_35 = arith.constant 0 : index
      %c0_36 = arith.constant 0 : index
      %59 = vector.load %arg8[%c0_35, %c0_36] : memref<1x128xf32, #tpu.memory_space<vmem>>, vector<1x128xf32>
      %60 = vector.broadcast %59 : vector<1x128xf32> to vector<16x128xf32>
      %61 = arith.addf %58, %60 : vector<16x128xf32>
      %62 = vector.extract_strided_slice %57 {offsets = [0, 0], sizes = [16, 32], strides = [1, 1]} : vector<16x384xf32> to vector<16x32xf32>
      %63 = arith.truncf %62 : vector<16x32xf32> to vector<16x32xbf16>
      %64 = vector.extract_strided_slice %57 {offsets = [0, 128], sizes = [16, 32], strides = [1, 1]} : vector<16x384xf32> to vector<16x32xf32>
      %65 = tpu.transpose %64, [1, 0] : vector<16x32xf32> -> vector<32x16xf32>
      %66 = arith.truncf %65 : vector<32x16xf32> to vector<32x16xbf16>
      %67 = vector.extract_strided_slice %57 {offsets = [0, 256], sizes = [16, 32], strides = [1, 1]} : vector<16x384xf32> to vector<16x32xf32>
      %68 = arith.truncf %67 : vector<16x32xf32> to vector<16x32xbf16>
      %cst_37 = arith.constant dense<0.000000e+00> : vector<16x16xf32>
      %69 = tpu.matmul %63, %66, %cst_37 {dimension_numbers = #tpu.dot_dimension_numbers<[1], [0], [0], [1], [0, 0, 1, 1], [], []>} : vector<16x32xbf16>, vector<32x16xbf16>, vector<16x16xf32> -> vector<16x16xf32>
      %cst_38 = arith.constant dense<0xFF800000> : vector<16xf32>
      %70 = vector.multi_reduction <maximumf>, %69, %cst_38 [1] : vector<16x16xf32> to vector<16xf32>
      %71 = vector.shape_cast %70 : vector<16xf32> to vector<16x1xf32>
      %72 = vector.broadcast %71 : vector<16x1xf32> to vector<16x16xf32>
      %73 = arith.subf %69, %72 : vector<16x16xf32>
      %74 = math.exp %73 : vector<16x16xf32>
      %cst_39 = arith.constant dense<0.000000e+00> : vector<16xf32>
      %75 = vector.multi_reduction <add>, %74, %cst_39 [1] : vector<16x16xf32> to vector<16xf32>
      %76 = vector.shape_cast %75 : vector<16xf32> to vector<16x1xf32>
      %77 = tpu.reciprocal %76 {approx = true} : vector<16x1xf32> -> vector<16x1xf32>
      %78 = vector.broadcast %77 : vector<16x1xf32> to vector<16x16xf32>
      %79 = arith.mulf %74, %78 : vector<16x16xf32>
      %80 = arith.truncf %79 : vector<16x16xf32> to vector<16x16xbf16>
      %cst_40 = arith.constant dense<0.000000e+00> : vector<16x32xf32>
      %81 = tpu.matmul %80, %68, %cst_40 {dimension_numbers = #tpu.dot_dimension_numbers<[1], [0], [0], [1], [0, 0, 1, 1], [], []>} : vector<16x16xbf16>, vector<16x32xbf16>, vector<16x32xf32> -> vector<16x32xf32>
      %82 = arith.truncf %81 : vector<16x32xf32> to vector<16x32xbf16>
      %c0_41 = arith.constant 0 : index
      %c0_42 = arith.constant 0 : index
      %83 = vector.load %arg7[%c0_41, %c0_42] : memref<128x128xbf16, #tpu.memory_space<vmem>>, vector<32x128xbf16>
      %cst_43 = arith.constant dense<0.000000e+00> : vector<16x128xf32>
      %84 = tpu.matmul %82, %83, %cst_43 {dimension_numbers = #tpu.dot_dimension_numbers<[1], [0], [0], [1], [0, 0, 1, 1], [], []>} : vector<16x32xbf16>, vector<32x128xbf16>, vector<16x128xf32> -> vector<16x128xf32>
      %85 = arith.addf %61, %84 : vector<16x128xf32>
      %86 = vector.extract_strided_slice %57 {offsets = [0, 32], sizes = [16, 32], strides = [1, 1]} : vector<16x384xf32> to vector<16x32xf32>
      %87 = arith.truncf %86 : vector<16x32xf32> to vector<16x32xbf16>
      %88 = vector.extract_strided_slice %57 {offsets = [0, 160], sizes = [16, 32], strides = [1, 1]} : vector<16x384xf32> to vector<16x32xf32>
      %89 = tpu.transpose %88, [1, 0] : vector<16x32xf32> -> vector<32x16xf32>
      %90 = arith.truncf %89 : vector<32x16xf32> to vector<32x16xbf16>
      %91 = vector.extract_strided_slice %57 {offsets = [0, 288], sizes = [16, 32], strides = [1, 1]} : vector<16x384xf32> to vector<16x32xf32>
      %92 = arith.truncf %91 : vector<16x32xf32> to vector<16x32xbf16>
      %cst_44 = arith.constant dense<0.000000e+00> : vector<16x16xf32>
      %93 = tpu.matmul %87, %90, %cst_44 {dimension_numbers = #tpu.dot_dimension_numbers<[1], [0], [0], [1], [0, 0, 1, 1], [], []>} : vector<16x32xbf16>, vector<32x16xbf16>, vector<16x16xf32> -> vector<16x16xf32>
      %cst_45 = arith.constant dense<0xFF800000> : vector<16xf32>
      %94 = vector.multi_reduction <maximumf>, %93, %cst_45 [1] : vector<16x16xf32> to vector<16xf32>
      %95 = vector.shape_cast %94 : vector<16xf32> to vector<16x1xf32>
      %96 = vector.broadcast %95 : vector<16x1xf32> to vector<16x16xf32>
      %97 = arith.subf %93, %96 : vector<16x16xf32>
      %98 = math.exp %97 : vector<16x16xf32>
      %cst_46 = arith.constant dense<0.000000e+00> : vector<16xf32>
      %99 = vector.multi_reduction <add>, %98, %cst_46 [1] : vector<16x16xf32> to vector<16xf32>
      %100 = vector.shape_cast %99 : vector<16xf32> to vector<16x1xf32>
      %101 = tpu.reciprocal %100 {approx = true} : vector<16x1xf32> -> vector<16x1xf32>
      %102 = vector.broadcast %101 : vector<16x1xf32> to vector<16x16xf32>
      %103 = arith.mulf %98, %102 : vector<16x16xf32>
      %104 = arith.truncf %103 : vector<16x16xf32> to vector<16x16xbf16>
      %cst_47 = arith.constant dense<0.000000e+00> : vector<16x32xf32>
      %105 = tpu.matmul %104, %92, %cst_47 {dimension_numbers = #tpu.dot_dimension_numbers<[1], [0], [0], [1], [0, 0, 1, 1], [], []>} : vector<16x16xbf16>, vector<16x32xbf16>, vector<16x32xf32> -> vector<16x32xf32>
      %106 = arith.truncf %105 : vector<16x32xf32> to vector<16x32xbf16>
      %c32 = arith.constant 32 : index
      %c0_48 = arith.constant 0 : index
      %107 = vector.load %arg7[%c32, %c0_48] : memref<128x128xbf16, #tpu.memory_space<vmem>>, vector<32x128xbf16>
      %cst_49 = arith.constant dense<0.000000e+00> : vector<16x128xf32>
      %108 = tpu.matmul %106, %107, %cst_49 {dimension_numbers = #tpu.dot_dimension_numbers<[1], [0], [0], [1], [0, 0, 1, 1], [], []>} : vector<16x32xbf16>, vector<32x128xbf16>, vector<16x128xf32> -> vector<16x128xf32>
      %109 = arith.addf %85, %108 : vector<16x128xf32>
      %110 = vector.extract_strided_slice %57 {offsets = [0, 64], sizes = [16, 32], strides = [1, 1]} : vector<16x384xf32> to vector<16x32xf32>
      %111 = arith.truncf %110 : vector<16x32xf32> to vector<16x32xbf16>
      %112 = vector.extract_strided_slice %57 {offsets = [0, 192], sizes = [16, 32], strides = [1, 1]} : vector<16x384xf32> to vector<16x32xf32>
      %113 = tpu.transpose %112, [1, 0] : vector<16x32xf32> -> vector<32x16xf32>
      %114 = arith.truncf %113 : vector<32x16xf32> to vector<32x16xbf16>
      %115 = vector.extract_strided_slice %57 {offsets = [0, 320], sizes = [16, 32], strides = [1, 1]} : vector<16x384xf32> to vector<16x32xf32>
      %116 = arith.truncf %115 : vector<16x32xf32> to vector<16x32xbf16>
      %cst_50 = arith.constant dense<0.000000e+00> : vector<16x16xf32>
      %117 = tpu.matmul %111, %114, %cst_50 {dimension_numbers = #tpu.dot_dimension_numbers<[1], [0], [0], [1], [0, 0, 1, 1], [], []>} : vector<16x32xbf16>, vector<32x16xbf16>, vector<16x16xf32> -> vector<16x16xf32>
      %cst_51 = arith.constant dense<0xFF800000> : vector<16xf32>
      %118 = vector.multi_reduction <maximumf>, %117, %cst_51 [1] : vector<16x16xf32> to vector<16xf32>
      %119 = vector.shape_cast %118 : vector<16xf32> to vector<16x1xf32>
      %120 = vector.broadcast %119 : vector<16x1xf32> to vector<16x16xf32>
      %121 = arith.subf %117, %120 : vector<16x16xf32>
      %122 = math.exp %121 : vector<16x16xf32>
      %cst_52 = arith.constant dense<0.000000e+00> : vector<16xf32>
      %123 = vector.multi_reduction <add>, %122, %cst_52 [1] : vector<16x16xf32> to vector<16xf32>
      %124 = vector.shape_cast %123 : vector<16xf32> to vector<16x1xf32>
      %125 = tpu.reciprocal %124 {approx = true} : vector<16x1xf32> -> vector<16x1xf32>
      %126 = vector.broadcast %125 : vector<16x1xf32> to vector<16x16xf32>
      %127 = arith.mulf %122, %126 : vector<16x16xf32>
      %128 = arith.truncf %127 : vector<16x16xf32> to vector<16x16xbf16>
      %cst_53 = arith.constant dense<0.000000e+00> : vector<16x32xf32>
      %129 = tpu.matmul %128, %116, %cst_53 {dimension_numbers = #tpu.dot_dimension_numbers<[1], [0], [0], [1], [0, 0, 1, 1], [], []>} : vector<16x16xbf16>, vector<16x32xbf16>, vector<16x32xf32> -> vector<16x32xf32>
      %130 = arith.truncf %129 : vector<16x32xf32> to vector<16x32xbf16>
      %c64 = arith.constant 64 : index
      %c0_54 = arith.constant 0 : index
      %131 = vector.load %arg7[%c64, %c0_54] : memref<128x128xbf16, #tpu.memory_space<vmem>>, vector<32x128xbf16>
      %cst_55 = arith.constant dense<0.000000e+00> : vector<16x128xf32>
      %132 = tpu.matmul %130, %131, %cst_55 {dimension_numbers = #tpu.dot_dimension_numbers<[1], [0], [0], [1], [0, 0, 1, 1], [], []>} : vector<16x32xbf16>, vector<32x128xbf16>, vector<16x128xf32> -> vector<16x128xf32>
      %133 = arith.addf %109, %132 : vector<16x128xf32>
      %134 = vector.extract_strided_slice %57 {offsets = [0, 96], sizes = [16, 32], strides = [1, 1]} : vector<16x384xf32> to vector<16x32xf32>
      %135 = arith.truncf %134 : vector<16x32xf32> to vector<16x32xbf16>
      %136 = vector.extract_strided_slice %57 {offsets = [0, 224], sizes = [16, 32], strides = [1, 1]} : vector<16x384xf32> to vector<16x32xf32>
      %137 = tpu.transpose %136, [1, 0] : vector<16x32xf32> -> vector<32x16xf32>
      %138 = arith.truncf %137 : vector<32x16xf32> to vector<32x16xbf16>
      %139 = vector.extract_strided_slice %57 {offsets = [0, 352], sizes = [16, 32], strides = [1, 1]} : vector<16x384xf32> to vector<16x32xf32>
      %140 = arith.truncf %139 : vector<16x32xf32> to vector<16x32xbf16>
      %cst_56 = arith.constant dense<0.000000e+00> : vector<16x16xf32>
      %141 = tpu.matmul %135, %138, %cst_56 {dimension_numbers = #tpu.dot_dimension_numbers<[1], [0], [0], [1], [0, 0, 1, 1], [], []>} : vector<16x32xbf16>, vector<32x16xbf16>, vector<16x16xf32> -> vector<16x16xf32>
      %cst_57 = arith.constant dense<0xFF800000> : vector<16xf32>
      %142 = vector.multi_reduction <maximumf>, %141, %cst_57 [1] : vector<16x16xf32> to vector<16xf32>
      %143 = vector.shape_cast %142 : vector<16xf32> to vector<16x1xf32>
      %144 = vector.broadcast %143 : vector<16x1xf32> to vector<16x16xf32>
      %145 = arith.subf %141, %144 : vector<16x16xf32>
      %146 = math.exp %145 : vector<16x16xf32>
      %cst_58 = arith.constant dense<0.000000e+00> : vector<16xf32>
      %147 = vector.multi_reduction <add>, %146, %cst_58 [1] : vector<16x16xf32> to vector<16xf32>
      %148 = vector.shape_cast %147 : vector<16xf32> to vector<16x1xf32>
      %149 = tpu.reciprocal %148 {approx = true} : vector<16x1xf32> -> vector<16x1xf32>
      %150 = vector.broadcast %149 : vector<16x1xf32> to vector<16x16xf32>
      %151 = arith.mulf %146, %150 : vector<16x16xf32>
      %152 = arith.truncf %151 : vector<16x16xf32> to vector<16x16xbf16>
      %cst_59 = arith.constant dense<0.000000e+00> : vector<16x32xf32>
      %153 = tpu.matmul %152, %140, %cst_59 {dimension_numbers = #tpu.dot_dimension_numbers<[1], [0], [0], [1], [0, 0, 1, 1], [], []>} : vector<16x16xbf16>, vector<16x32xbf16>, vector<16x32xf32> -> vector<16x32xf32>
      %154 = arith.truncf %153 : vector<16x32xf32> to vector<16x32xbf16>
      %c96 = arith.constant 96 : index
      %c0_60 = arith.constant 0 : index
      %155 = vector.load %arg7[%c96, %c0_60] : memref<128x128xbf16, #tpu.memory_space<vmem>>, vector<32x128xbf16>
      %cst_61 = arith.constant dense<0.000000e+00> : vector<16x128xf32>
      %156 = tpu.matmul %154, %155, %cst_61 {dimension_numbers = #tpu.dot_dimension_numbers<[1], [0], [0], [1], [0, 0, 1, 1], [], []>} : vector<16x32xbf16>, vector<32x128xbf16>, vector<16x128xf32> -> vector<16x128xf32>
      %157 = arith.addf %133, %156 : vector<16x128xf32>
      %158 = arith.addf %27, %157 : vector<16x128xf32>
      %c0_62 = arith.constant 0 : index
      %c0_63 = arith.constant 0 : index
      %159 = vector.load %arg16[%c0_62, %c0_63] : memref<16x128xf32, #tpu.memory_space<vmem>>, vector<16x128xf32>
      tpu.vector_store %arg16[%c0_62, %c0_63], %158 {strides = array<i32>} : memref<16x128xf32, #tpu.memory_space<vmem>>, vector<16x128xf32>,
      %c0_64 = arith.constant 0 : index
      %c0_65 = arith.constant 0 : index
      %160 = vector.load %arg9[%c0_64, %c0_65] : memref<1x128xf32, #tpu.memory_space<vmem>>, vector<1x128xf32>
      %c0_66 = arith.constant 0 : index
      %c0_67 = arith.constant 0 : index
      %161 = vector.load %arg10[%c0_66, %c0_67] : memref<1x128xf32, #tpu.memory_space<vmem>>, vector<1x128xf32>
      %cst_68 = arith.constant dense<0.000000e+00> : vector<16xf32>
      %162 = vector.multi_reduction <add>, %158, %cst_68 [1] : vector<16x128xf32> to vector<16xf32>
      %163 = vector.shape_cast %162 : vector<16xf32> to vector<16x1xf32>
      %cst_69 = arith.constant 1.280000e+02 : f32
      %164 = vector.broadcast %cst_69 : f32 to vector<16x1xf32>
      %165 = arith.divf %163, %164 : vector<16x1xf32>
      %166 = vector.broadcast %165 : vector<16x1xf32> to vector<16x128xf32>
      %167 = arith.subf %158, %166 : vector<16x128xf32>
      %168 = arith.mulf %167, %167 : vector<16x128xf32>
      %cst_70 = arith.constant dense<0.000000e+00> : vector<16xf32>
      %169 = vector.multi_reduction <add>, %168, %cst_70 [1] : vector<16x128xf32> to vector<16xf32>
      %170 = vector.shape_cast %169 : vector<16xf32> to vector<16x1xf32>
      %cst_71 = arith.constant 1.280000e+02 : f32
      %171 = vector.broadcast %cst_71 : f32 to vector<16x1xf32>
      %172 = arith.divf %170, %171 : vector<16x1xf32>
      %173 = vector.broadcast %165 : vector<16x1xf32> to vector<16x128xf32>
      %174 = arith.subf %158, %173 : vector<16x128xf32>
      %cst_72 = arith.constant 9.99999974E-6 : f32
      %175 = vector.broadcast %cst_72 : f32 to vector<16x1xf32>
      %176 = arith.addf %172, %175 : vector<16x1xf32>
      %177 = math.rsqrt %176 : vector<16x1xf32>
      %178 = vector.broadcast %177 : vector<16x1xf32> to vector<16x128xf32>
      %179 = arith.mulf %174, %178 : vector<16x128xf32>
      %180 = vector.broadcast %160 : vector<1x128xf32> to vector<16x128xf32>
      %181 = arith.mulf %179, %180 : vector<16x128xf32>
      %182 = vector.broadcast %161 : vector<1x128xf32> to vector<16x128xf32>
      %183 = arith.addf %181, %182 : vector<16x128xf32>
      %184 = arith.truncf %183 : vector<16x128xf32> to vector<16x128xbf16>
      %c0_73 = arith.constant 0 : index
      %c0_74 = arith.constant 0 : index
      %185 = vector.load %arg17[%c0_73, %c0_74] : memref<16x128xbf16, #tpu.memory_space<vmem>>, vector<16x128xbf16>
      tpu.vector_store %arg17[%c0_73, %c0_74], %184 {strides = array<i32>} : memref<16x128xbf16, #tpu.memory_space<vmem>>, vector<16x128xbf16>,
      %cst_75 = arith.constant 0.000000e+00 : f32
      %186 = vector.broadcast %cst_75 : f32 to vector<16x128xf32>
      %c0_76 = arith.constant 0 : index
      %c0_77 = arith.constant 0 : index
      %187 = vector.load %arg18[%c0_76, %c0_77] : memref<16x128xf32, #tpu.memory_space<vmem>>, vector<16x128xf32>
      tpu.vector_store %arg18[%c0_76, %c0_77], %186 {strides = array<i32>} : memref<16x128xf32, #tpu.memory_space<vmem>>, vector<16x128xf32>,
    } else {
    }
    %c0 = arith.constant 0 : index
    %c0_1 = arith.constant 0 : index
    %3 = vector.load %arg17[%c0, %c0_1] : memref<16x128xbf16, #tpu.memory_space<vmem>>, vector<16x128xbf16>
    %c0_2 = arith.constant 0 : index
    %c0_3 = arith.constant 0 : index
    %4 = vector.load %arg11[%c0_2, %c0_3] : memref<128x256xbf16, #tpu.memory_space<vmem>>, vector<128x256xbf16>
    %cst = arith.constant dense<0.000000e+00> : vector<16x256xf32>
    %5 = tpu.matmul %3, %4, %cst {dimension_numbers = #tpu.dot_dimension_numbers<[1], [0], [0], [1], [0, 0, 1, 1], [], []>} : vector<16x128xbf16>, vector<128x256xbf16>, vector<16x256xf32> -> vector<16x256xf32>
    %c0_4 = arith.constant 0 : index
    %c0_5 = arith.constant 0 : index
    %6 = vector.load %arg12[%c0_4, %c0_5] : memref<1x256xf32, #tpu.memory_space<vmem>>, vector<1x256xf32>
    %7 = vector.broadcast %6 : vector<1x256xf32> to vector<16x256xf32>
    %8 = arith.addf %5, %7 : vector<16x256xf32>
    %cst_6 = arith.constant 5.000000e-01 : f32
    %9 = vector.broadcast %cst_6 : f32 to vector<16x256xf32>
    %10 = arith.mulf %9, %8 : vector<16x256xf32>
    %cst_7 = arith.constant 0.707106769 : f32
    %11 = vector.broadcast %cst_7 : f32 to vector<16x256xf32>
    %12 = arith.mulf %8, %11 : vector<16x256xf32>
    %13 = math.erf %12 : vector<16x256xf32>
    %cst_8 = arith.constant 1.000000e+00 : f32
    %14 = vector.broadcast %cst_8 : f32 to vector<16x256xf32>
    %15 = arith.addf %14, %13 : vector<16x256xf32>
    %16 = arith.mulf %10, %15 : vector<16x256xf32>
    %c0_9 = arith.constant 0 : index
    %c0_10 = arith.constant 0 : index
    %17 = vector.load %arg18[%c0_9, %c0_10] : memref<16x128xf32, #tpu.memory_space<vmem>>, vector<16x128xf32>
    %18 = arith.truncf %16 : vector<16x256xf32> to vector<16x256xbf16>
    %c0_11 = arith.constant 0 : index
    %c0_12 = arith.constant 0 : index
    %19 = vector.load %arg13[%c0_11, %c0_12] : memref<256x128xbf16, #tpu.memory_space<vmem>>, vector<256x128xbf16>
    %cst_13 = arith.constant dense<0.000000e+00> : vector<16x128xf32>
    %20 = tpu.matmul %18, %19, %cst_13 {dimension_numbers = #tpu.dot_dimension_numbers<[1], [0], [0], [1], [0, 0, 1, 1], [], []>} : vector<16x256xbf16>, vector<256x128xbf16>, vector<16x128xf32> -> vector<16x128xf32>
    %21 = arith.addf %17, %20 : vector<16x128xf32>
    %c0_14 = arith.constant 0 : index
    %c0_15 = arith.constant 0 : index
    %22 = vector.load %arg18[%c0_14, %c0_15] : memref<16x128xf32, #tpu.memory_space<vmem>>, vector<16x128xf32>
    tpu.vector_store %arg18[%c0_14, %c0_15], %21 {strides = array<i32>} : memref<16x128xf32, #tpu.memory_space<vmem>>, vector<16x128xf32>,
    %c1_i32 = arith.constant 1 : i32
    %23 = arith.cmpi eq, %arg1, %c1_i32 : i32
    %24 = arith.extui %23 : i1 to i32
    %c0_i32_16 = arith.constant 0 : i32
    %25 = arith.cmpi ne, %24, %c0_i32_16 : i32
    scf.if %25 {
      %c0_17 = arith.constant 0 : index
      %c0_18 = arith.constant 0 : index
      %26 = vector.load %arg16[%c0_17, %c0_18] : memref<16x128xf32, #tpu.memory_space<vmem>>, vector<16x128xf32>
      %c0_19 = arith.constant 0 : index
      %c0_20 = arith.constant 0 : index
      %27 = vector.load %arg18[%c0_19, %c0_20] : memref<16x128xf32, #tpu.memory_space<vmem>>, vector<16x128xf32>
      %28 = arith.addf %26, %27 : vector<16x128xf32>
      %c0_21 = arith.constant 0 : index
      %c0_22 = arith.constant 0 : index
      %29 = vector.load %arg14[%c0_21, %c0_22] : memref<1x128xf32, #tpu.memory_space<vmem>>, vector<1x128xf32>
      %30 = vector.broadcast %29 : vector<1x128xf32> to vector<16x128xf32>
      %31 = arith.addf %28, %30 : vector<16x128xf32>
      %c0_23 = arith.constant 0 : index
      %c0_24 = arith.constant 0 : index
      %c0_25 = arith.constant 0 : index
      %32 = vector.load %arg15[%c0_23, %c0_24, %c0_25] : memref<1x16x128xf32, #tpu.memory_space<vmem>>, vector<1x16x128xf32>
      %33 = vector.shape_cast %32 : vector<1x16x128xf32> to vector<16x128xf32>
      %34 = vector.shape_cast %31 : vector<16x128xf32> to vector<1x16x128xf32>
      tpu.vector_store %arg15[%c0_23, %c0_24, %c0_25], %34 {strides = array<i32>} : memref<1x16x128xf32, #tpu.memory_space<vmem>>, vector<1x16x128xf32>,
    } else {
    }
    return
  }
  func.func @transform_0(%arg0: i32, %arg1: i32) -> (i32, i32, i32) {
    %c0_i32 = arith.constant 0 : i32
    %c0_i32_0 = arith.constant 0 : i32
    %c0_i32_1 = arith.constant 0 : i32
    return %arg0, %c0_i32, %c0_i32_0 : i32, i32, i32
  }
  func.func @transform_1(%arg0: i32, %arg1: i32) -> (i32, i32) {
    %c0_i32 = arith.constant 0 : i32
    %c0_i32_0 = arith.constant 0 : i32
    %c0_i32_1 = arith.constant 0 : i32
    return %c0_i32, %c0_i32_0 : i32, i32
  }
  func.func @transform_2(%arg0: i32, %arg1: i32) -> (i32, i32) {
    %c0_i32 = arith.constant 0 : i32
    %c0_i32_0 = arith.constant 0 : i32
    %c0_i32_1 = arith.constant 0 : i32
    return %c0_i32, %c0_i32_0 : i32, i32
  }
  func.func @transform_3(%arg0: i32, %arg1: i32) -> (i32, i32) {
    %c0_i32 = arith.constant 0 : i32
    %c0_i32_0 = arith.constant 0 : i32
    %c0_i32_1 = arith.constant 0 : i32
    return %c0_i32, %c0_i32_0 : i32, i32
  }
  func.func @transform_4(%arg0: i32, %arg1: i32) -> (i32, i32) {
    %c0_i32 = arith.constant 0 : i32
    %c0_i32_0 = arith.constant 0 : i32
    %c0_i32_1 = arith.constant 0 : i32
    return %c0_i32, %c0_i32_0 : i32, i32
  }
  func.func @transform_5(%arg0: i32, %arg1: i32) -> (i32, i32) {
    %c0_i32 = arith.constant 0 : i32
    %c0_i32_0 = arith.constant 0 : i32
    %c0_i32_1 = arith.constant 0 : i32
    return %c0_i32, %c0_i32_0 : i32, i32
  }
  func.func @transform_6(%arg0: i32, %arg1: i32) -> (i32, i32) {
    %c0_i32 = arith.constant 0 : i32
    %c0_i32_0 = arith.constant 0 : i32
    %c0_i32_1 = arith.constant 0 : i32
    return %c0_i32, %c0_i32_0 : i32, i32
  }
  func.func @transform_7(%arg0: i32, %arg1: i32) -> (i32, i32) {
    %c0_i32 = arith.constant 0 : i32
    %c0_i32_0 = arith.constant 0 : i32
    %c0_i32_1 = arith.constant 0 : i32
    return %c0_i32, %c0_i32_0 : i32, i32
  }
  func.func @transform_8(%arg0: i32, %arg1: i32) -> (i32, i32) {
    %c0_i32 = arith.constant 0 : i32
    %c0_i32_0 = arith.constant 0 : i32
    %c0_i32_1 = arith.constant 0 : i32
    return %c0_i32, %c0_i32_0 : i32, i32
  }
  func.func @transform_9(%arg0: i32, %arg1: i32) -> (i32, i32) {
    %c0_i32 = arith.constant 0 : i32
    %c0_i32_0 = arith.constant 0 : i32
    return %c0_i32, %arg1 : i32, i32
  }
  func.func @transform_10(%arg0: i32, %arg1: i32) -> (i32, i32) {
    %c0_i32 = arith.constant 0 : i32
    %c0_i32_0 = arith.constant 0 : i32
    return %c0_i32, %arg1 : i32, i32
  }
  func.func @transform_11(%arg0: i32, %arg1: i32) -> (i32, i32) {
    %c0_i32 = arith.constant 0 : i32
    %c0_i32_0 = arith.constant 0 : i32
    return %arg1, %c0_i32 : i32, i32
  }
  func.func @transform_12(%arg0: i32, %arg1: i32) -> (i32, i32) {
    %c0_i32 = arith.constant 0 : i32
    %c0_i32_0 = arith.constant 0 : i32
    %c0_i32_1 = arith.constant 0 : i32
    return %c0_i32, %c0_i32_0 : i32, i32
  }
  func.func @transform_13(%arg0: i32, %arg1: i32) -> (i32, i32, i32) {
    %c0_i32 = arith.constant 0 : i32
    %c0_i32_0 = arith.constant 0 : i32
    %c0_i32_1 = arith.constant 0 : i32
    return %arg0, %c0_i32, %c0_i32_0 : i32, i32, i32
  }
}

</mosaic_0001>

<llo_original>
// kernel: tpu_custom_call.1
$region0: #{tpu_custom_call.1}
  #allocation0 [shape = 'u32[]', space=smem, size = 0x4, offset = 0x4, fixed_abs, tag = 'smem constant byte address 0x4 - core index']
  #allocation1 [shape = 'u32[72,128]{1,0:T(1,128)}', space=vmem, size = 0x9000, scoped, tag = 'internal scratch']
  #allocation2 [shape = 'f32[16,128]{1,0:T(8,128)}', space=vmem, size = 0x2000, scoped, tag = 'scratch operand']
  #allocation3 [shape = 'bf16[16,128]{1,0:T(8,128)(2,1)}', space=vmem, size = 0x1000, scoped, tag = 'scratch operand']
  #allocation4 [shape = 'f32[16,128]{1,0:T(8,128)}', space=vmem, size = 0x2000, scoped, tag = 'scratch operand']
  %s0 = inlined_call_operand.hbm [shape: f32[2,16,128], index: 0, kind: input, shape index: {}]
  %s1 = inlined_call_operand.hbm [shape: f32[1,128], index: 1, kind: input, shape index: {}]
  %s2 = inlined_call_operand.hbm [shape: f32[1,128], index: 2, kind: input, shape index: {}]
  %s3 = inlined_call_operand.hbm [shape: bf16[128,384], index: 3, kind: input, shape index: {}]
  %s4 = inlined_call_operand.vmem [shape: f32[1,384], index: 4, kind: input, shape index: {}]
  %s5 = inlined_call_operand.hbm [shape: bf16[128,128], index: 5, kind: input, shape index: {}]
  %s6 = inlined_call_operand.hbm [shape: f32[1,128], index: 6, kind: input, shape index: {}]
  %s7 = inlined_call_operand.hbm [shape: f32[1,128], index: 7, kind: input, shape index: {}]
  %s8 = inlined_call_operand.hbm [shape: f32[1,128], index: 8, kind: input, shape index: {}]
  %s9 = inlined_call_operand.hbm [shape: bf16[128,512], index: 9, kind: input, shape index: {}]
  %s10 = inlined_call_operand.vmem [shape: f32[1,512], index: 10, kind: input, shape index: {}]
  %s11 = inlined_call_operand.hbm [shape: bf16[512,128], index: 11, kind: input, shape index: {}]
  %s12 = inlined_call_operand.vmem [shape: f32[1,128], index: 12, kind: input, shape index: {}]
  %s13 = inlined_call_operand.hbm [shape: f32[2,16,128], index: 13, kind: output, shape index: {}]
  %s14 = sld [smem:[#allocation0]]
  $region133: #{tpu_custom_call.1} parent=0
    _
  %s16 = ssub.s32 1, %s14
  %s17 = scalar_select 0, %s16, %s14
  $region1: #{tpu_custom_call.1} parent=0
    #allocation5 [shape = 'u8[16384]{0}', space=vmem, size = 0x4000, scoped, tag = 'input window, operand 0']
    #allocation6 [shape = 's32[2]{0}', space=sflag, size = 0x8, scoped, tag = 'scoped memory for tpu_custom_call.1']
    #allocation7 [shape = 's32[2]{0}', space=sflag, size = 0x8, scoped, tag = 'scoped memory for tpu_custom_call.1']
    #allocation8 [shape = 'u8[512]{0}', space=vmem, size = 0x400, scoped, tag = 'input window, operand 1, single buffered']
    #allocation9 [shape = 's32[1]{0}', space=sflag, size = 0x4, scoped, tag = 'scoped memory for tpu_custom_call.1']
    #allocation10 [shape = 'u8[512]{0}', space=vmem, size = 0x400, scoped, tag = 'input window, operand 2, single buffered']
    #allocation11 [shape = 'u8[98304]{0}', space=vmem, size = 0x18000, scoped, tag = 'input window, operand 3, single buffered']
    #allocation12 [shape = 's32[1]{0}', space=sflag, size = 0x4, scoped, tag = 'scoped memory for tpu_custom_call.1']
    #allocation13 [shape = 'u8[32768]{0}', space=vmem, size = 0x8000, scoped, tag = 'input window, operand 5, single buffered']
    #allocation14 [shape = 'u8[512]{0}', space=vmem, size = 0x400, scoped, tag = 'input window, operand 6, single buffered']
    #allocation15 [shape = 's32[1]{0}', space=sflag, size = 0x4, scoped, tag = 'scoped memory for tpu_custom_call.1']
    #allocation16 [shape = 'u8[512]{0}', space=vmem, size = 0x400, scoped, tag = 'input window, operand 7, single buffered']
    #allocation17 [shape = 'u8[512]{0}', space=vmem, size = 0x400, scoped, tag = 'input window, operand 8, single buffered']
    #allocation18 [shape = 's32[1]{0}', space=sflag, size = 0x4, scoped, tag = 'scoped memory for tpu_custom_call.1']
    #allocation19 [shape = 'u8[131072]{0}', space=vmem, size = 0x20000, scoped, tag = 'input window, operand 9']
    #allocation20 [shape = 'u8[131072]{0}', space=vmem, size = 0x20000, scoped, tag = 'input window, operand 11']
    #allocation21 [shape = 'u8[16384]{0}', space=vmem, size = 0x4000, scoped, tag = 'output window, operand 0']
    %18 = vsyncpa [#allocation6], 0
    %s19 = scalar_lea.sflag [#allocation6], 1
    %20 = vsyncpa %s19, 0
    %21 = vsyncpa [#allocation9], 0
    %22 = vsyncpa [#allocation12], 0
    %23 = vsyncpa [#allocation15], 0
    %24 = vsyncpa [#allocation18], 0
    %25 = vsyncpa [#allocation7], 0
    %s26 = scalar_lea.sflag [#allocation7], 1
    %27 = vsyncpa %s26, 0
    loop: start=0, step=1, limit=6
    $region2: #{tpu_custom_call.1} parent=1 // loop_pre_header
      _
    $region3: #{tpu_custom_call.1} parent=1 // loop_header
      %s29 = sphi 0, %s33
      %p30 = scmp.ge.s32.totalorder %s29, 6
      %s36 = sphi 0, %s48
      %s37 = sphi 0, %s44
      %s38 = sphi 0, %s36
      %s39 = sphi 0, %s37
      %s40 = sphi 0, %s38
      %s41 = sphi 0, %s39
      %s51 = sphi 0, %s53
      %s54 = sphi 0, %s51
      %s55 = sphi 0, %s54
      %s71 = sphi 0, %s55
      %s75 = sphi 0, %s75
      %s77 = sphi 0, %s75
      %s78 = sphi 0, %s77
      %s92 = sphi 0, %s78
      %s96 = sphi 0, %s96
      %s98 = sphi 0, %s96
      %s99 = sphi 0, %s98
      %s113 = sphi 0, %s99
      %s117 = sphi 0, %s117
      %s119 = sphi 0, %s117
      %s120 = sphi 0, %s119
      %s134 = sphi 0, %s120
      %s138 = sphi 0, %s138
      %s140 = sphi 0, %s138
      %s141 = sphi 0, %s140
      %s155 = sphi 0, %s141
      %s159 = sphi 0, %s159
      %s161 = sphi 0, %s159
      %s162 = sphi 0, %s161
      %s176 = sphi 0, %s162
      %s180 = sphi 0, %s180
      %s182 = sphi 0, %s180
      %s183 = sphi 0, %s182
      %s197 = sphi 0, %s183
      %s201 = sphi 0, %s201
      %s203 = sphi 0, %s201
      %s204 = sphi 0, %s203
      %s218 = sphi 0, %s204
      %s222 = sphi 0, %s222
      %s224 = sphi 0, %s222
      %s225 = sphi 0, %s224
      %s239 = sphi 0, %s225
      %s245 = sphi 0, %s247
      %s248 = sphi 0, %s245
      %s249 = sphi 0, %s248
      %s265 = sphi 0, %s249
      %s271 = sphi 0, %s273
      %s274 = sphi 0, %s271
      %s275 = sphi 0, %s274
      %s291 = sphi 0, %s275
      %s297 = sphi 0, %s299
      %s300 = sphi 0, %s297
      %s301 = sphi 0, %s300
      %s317 = sphi 0, %s301
      %s321 = sphi 0, %s321
      %s323 = sphi 0, %s321
      %s324 = sphi 0, %s323
      %s338 = sphi 0, %s324
      %s344 = sphi 0, %s346
      %s347 = sphi 0, %s344
      %s348 = sphi 0, %s347
      %s364 = sphi 0, %s348
    $region4: #{tpu_custom_call.1} parent=1 // loop_header_branch
      %32 = sbr.rel (%p30) target = $region8
    $region5: #{tpu_custom_call.1} parent=1 // loop_body
      %s34 = ssub.s32 %s29, 1
      %s35 = ssub.s32 %s29, 2
      %s42 = sadd.s32 1, %s37
      %p43 = scmp.ge.s32.totalorder %s42, 2
      %s44 = scalar_select %p43, 0, %s42
      %s45 = sadd.s32 1, %s36
      %s46 = scalar_select %p43, %s45, %s36
      %p47 = scmp.ge.s32.totalorder %s46, 2
      %s48 = scalar_select %p47, 0, %s46
      %s49 = ssub.s32 %s36, %s48
      %p50 = scmp.eq.s32.totalorder %s49, 0
      %s52 = sadd.s32 %s51, 1
      %s53 = scalar_select %p50, %s51, %s52
      %p56 = pneg %p50
      %p57 = scmp.eq.s32.totalorder %s29, 3
      %p58 = por %p56, %p57
      %p59 = scmp.ne.s32.totalorder %s51, %s54
      %p60 = scmp.eq.s32.totalorder %s29, 0
      %p61 = por %p59, %p60
      %p62 = scmp.ne.s32.totalorder %s51, %s54
      %p63 = scmp.eq.s32.totalorder %s34, 3
      %p64 = por %p62, %p63
      %p65 = scmp.ne.s32.totalorder %s54, %s55
      %p66 = scmp.eq.s32.totalorder %s34, 0
      %p67 = por %p65, %p66
      %p68 = scmp.ne.s32.totalorder %s54, %s55
      %p69 = scmp.eq.s32.totalorder %s35, 3
      %p70 = por %p68, %p69
      %p72 = scmp.ne.s32.totalorder %s55, %s71
      %p73 = scmp.eq.s32.totalorder %s35, 0
      %p74 = por %p72, %p73
      %s76 = sadd.s32 %s75, 1
      %p79 = scmp.eq.s32.totalorder %s29, 3
      %p80 = scmp.ne.s32.totalorder %s75, %s77
      %p81 = scmp.eq.s32.totalorder %s29, 0
      %p82 = por %p80, %p81
      %p83 = scmp.ne.s32.totalorder %s75, %s77
      %p84 = scmp.eq.s32.totalorder %s34, 3
      %p85 = por %p83, %p84
      %p86 = scmp.ne.s32.totalorder %s77, %s78
      %p87 = scmp.eq.s32.totalorder %s34, 0
      %p88 = por %p86, %p87
      %p89 = scmp.ne.s32.totalorder %s77, %s78
      %p90 = scmp.eq.s32.totalorder %s35, 3
      %p91 = por %p89, %p90
      %p93 = scmp.ne.s32.totalorder %s78, %s92
      %p94 = scmp.eq.s32.totalorder %s35, 0
      %p95 = por %p93, %p94
      %s97 = sadd.s32 %s96, 1
      %p100 = scmp.eq.s32.totalorder %s29, 3
      %p101 = scmp.ne.s32.totalorder %s96, %s98
      %p102 = scmp.eq.s32.totalorder %s29, 0
      %p103 = por %p101, %p102
      %p104 = scmp.ne.s32.totalorder %s96, %s98
      %p105 = scmp.eq.s32.totalorder %s34, 3
      %p106 = por %p104, %p105
      %p107 = scmp.ne.s32.totalorder %s98, %s99
      %p108 = scmp.eq.s32.totalorder %s34, 0
      %p109 = por %p107, %p108
      %p110 = scmp.ne.s32.totalorder %s98, %s99
      %p111 = scmp.eq.s32.totalorder %s35, 3
      %p112 = por %p110, %p111
      %p114 = scmp.ne.s32.totalorder %s99, %s113
      %p115 = scmp.eq.s32.totalorder %s35, 0
      %p116 = por %p114, %p115
      %s118 = sadd.s32 %s117, 1
      %p121 = scmp.eq.s32.totalorder %s29, 3
      %p122 = scmp.ne.s32.totalorder %s117, %s119
      %p123 = scmp.eq.s32.totalorder %s29, 0
      %p124 = por %p122, %p123
      %p125 = scmp.ne.s32.totalorder %s117, %s119
      %p126 = scmp.eq.s32.totalorder %s34, 3
      %p127 = por %p125, %p126
      %p128 = scmp.ne.s32.totalorder %s119, %s120
      %p129 = scmp.eq.s32.totalorder %s34, 0
      %p130 = por %p128, %p129
      %p131 = scmp.ne.s32.totalorder %s119, %s120
      %p132 = scmp.eq.s32.totalorder %s35, 3
      %p133 = por %p131, %p132
      %p135 = scmp.ne.s32.totalorder %s120, %s134
      %p136 = scmp.eq.s32.totalorder %s35, 0
      %p137 = por %p135, %p136
      %s139 = sadd.s32 %s138, 1
      %p142 = scmp.eq.s32.totalorder %s29, 3
      %p143 = scmp.ne.s32.totalorder %s138, %s140
      %p144 = scmp.eq.s32.totalorder %s29, 0
      %p145 = por %p143, %p144
      %p146 = scmp.ne.s32.totalorder %s138, %s140
      %p147 = scmp.eq.s32.totalorder %s34, 3
      %p148 = por %p146, %p147
      %p149 = scmp.ne.s32.totalorder %s140, %s141
      %p150 = scmp.eq.s32.totalorder %s34, 0
      %p151 = por %p149, %p150
      %p152 = scmp.ne.s32.totalorder %s140, %s141
      %p153 = scmp.eq.s32.totalorder %s35, 3
      %p154 = por %p152, %p153
      %p156 = scmp.ne.s32.totalorder %s141, %s155
      %p157 = scmp.eq.s32.totalorder %s35, 0
      %p158 = por %p156, %p157
      %s160 = sadd.s32 %s159, 1
      %p163 = scmp.eq.s32.totalorder %s29, 3
      %p164 = scmp.ne.s32.totalorder %s159, %s161
      %p165 = scmp.eq.s32.totalorder %s29, 0
      %p166 = por %p164, %p165
      %p167 = scmp.ne.s32.totalorder %s159, %s161
      %p168 = scmp.eq.s32.totalorder %s34, 3
      %p169 = por %p167, %p168
      %p170 = scmp.ne.s32.totalorder %s161, %s162
      %p171 = scmp.eq.s32.totalorder %s34, 0
      %p172 = por %p170, %p171
      %p173 = scmp.ne.s32.totalorder %s161, %s162
      %p174 = scmp.eq.s32.totalorder %s35, 3
      %p175 = por %p173, %p174
      %p177 = scmp.ne.s32.totalorder %s162, %s176
      %p178 = scmp.eq.s32.totalorder %s35, 0
      %p179 = por %p177, %p178
      %s181 = sadd.s32 %s180, 1
      %p184 = scmp.eq.s32.totalorder %s29, 3
      %p185 = scmp.ne.s32.totalorder %s180, %s182
      %p186 = scmp.eq.s32.totalorder %s29, 0
      %p187 = por %p185, %p186
      %p188 = scmp.ne.s32.totalorder %s180, %s182
      %p189 = scmp.eq.s32.totalorder %s34, 3
      %p190 = por %p188, %p189
      %p191 = scmp.ne.s32.totalorder %s182, %s183
      %p192 = scmp.eq.s32.totalorder %s34, 0
      %p193 = por %p191, %p192
      %p194 = scmp.ne.s32.totalorder %s182, %s183
      %p195 = scmp.eq.s32.totalorder %s35, 3
      %p196 = por %p194, %p195
      %p198 = scmp.ne.s32.totalorder %s183, %s197
      %p199 = scmp.eq.s32.totalorder %s35, 0
      %p200 = por %p198, %p199
      %s202 = sadd.s32 %s201, 1
      %p205 = scmp.eq.s32.totalorder %s29, 3
      %p206 = scmp.ne.s32.totalorder %s201, %s203
      %p207 = scmp.eq.s32.totalorder %s29, 0
      %p208 = por %p206, %p207
      %p209 = scmp.ne.s32.totalorder %s201, %s203
      %p210 = scmp.eq.s32.totalorder %s34, 3
      %p211 = por %p209, %p210
      %p212 = scmp.ne.s32.totalorder %s203, %s204
      %p213 = scmp.eq.s32.totalorder %s34, 0
      %p214 = por %p212, %p213
      %p215 = scmp.ne.s32.totalorder %s203, %s204
      %p216 = scmp.eq.s32.totalorder %s35, 3
      %p217 = por %p215, %p216
      %p219 = scmp.ne.s32.totalorder %s204, %s218
      %p220 = scmp.eq.s32.totalorder %s35, 0
      %p221 = por %p219, %p220
      %s223 = sadd.s32 %s222, 1
      %p226 = scmp.eq.s32.totalorder %s29, 3
      %p227 = scmp.ne.s32.totalorder %s222, %s224
      %p228 = scmp.eq.s32.totalorder %s29, 0
      %p229 = por %p227, %p228
      %p230 = scmp.ne.s32.totalorder %s222, %s224
      %p231 = scmp.eq.s32.totalorder %s34, 3
      %p232 = por %p230, %p231
      %p233 = scmp.ne.s32.totalorder %s224, %s225
      %p234 = scmp.eq.s32.totalorder %s34, 0
      %p235 = por %p233, %p234
      %p236 = scmp.ne.s32.totalorder %s224, %s225
      %p237 = scmp.eq.s32.totalorder %s35, 3
      %p238 = por %p236, %p237
      %p240 = scmp.ne.s32.totalorder %s225, %s239
      %p241 = scmp.eq.s32.totalorder %s35, 0
      %p242 = por %p240, %p241
      %s243 = ssub.s32 %s37, %s44
      %p244 = scmp.eq.s32.totalorder %s243, 0
      %s246 = sadd.s32 %s245, 1
      %s247 = scalar_select %p244, %s245, %s246
      %p250 = pneg %p244
      %p251 = scmp.eq.s32.totalorder %s29, 3
      %p252 = por %p250, %p251
      %p253 = scmp.ne.s32.totalorder %s245, %s248
      %p254 = scmp.eq.s32.totalorder %s29, 0
      %p255 = por %p253, %p254
      %p256 = scmp.ne.s32.totalorder %s245, %s248
      %p257 = scmp.eq.s32.totalorder %s34, 3
      %p258 = por %p256, %p257
      %p259 = scmp.ne.s32.totalorder %s248, %s249
      %p260 = scmp.eq.s32.totalorder %s34, 0
      %p261 = por %p259, %p260
      %p262 = scmp.ne.s32.totalorder %s248, %s249
      %p263 = scmp.eq.s32.totalorder %s35, 3
      %p264 = por %p262, %p263
      %p266 = scmp.ne.s32.totalorder %s249, %s265
      %p267 = scmp.eq.s32.totalorder %s35, 0
      %p268 = por %p266, %p267
      %s269 = ssub.s32 %s37, %s44
      %p270 = scmp.eq.s32.totalorder %s269, 0
      %s272 = sadd.s32 %s271, 1
      %s273 = scalar_select %p270, %s271, %s272
      %p276 = pneg %p270
      %p277 = scmp.eq.s32.totalorder %s29, 3
      %p278 = por %p276, %p277
      %p279 = scmp.ne.s32.totalorder %s271, %s274
      %p280 = scmp.eq.s32.totalorder %s29, 0
      %p281 = por %p279, %p280
      %p282 = scmp.ne.s32.totalorder %s271, %s274
      %p283 = scmp.eq.s32.totalorder %s34, 3
      %p284 = por %p282, %p283
      %p285 = scmp.ne.s32.totalorder %s274, %s275
      %p286 = scmp.eq.s32.totalorder %s34, 0
      %p287 = por %p285, %p286
      %p288 = scmp.ne.s32.totalorder %s274, %s275
      %p289 = scmp.eq.s32.totalorder %s35, 3
      %p290 = por %p288, %p289
      %p292 = scmp.ne.s32.totalorder %s275, %s291
      %p293 = scmp.eq.s32.totalorder %s35, 0
      %p294 = por %p292, %p293
      %s295 = ssub.s32 %s37, %s44
      %p296 = scmp.eq.s32.totalorder %s295, 0
      %s298 = sadd.s32 %s297, 1
      %s299 = scalar_select %p296, %s297, %s298
      %p302 = pneg %p296
      %p303 = scmp.eq.s32.totalorder %s29, 3
      %p304 = por %p302, %p303
      %p305 = scmp.ne.s32.totalorder %s297, %s300
      %p306 = scmp.eq.s32.totalorder %s29, 0
      %p307 = por %p305, %p306
      %p308 = scmp.ne.s32.totalorder %s297, %s300
      %p309 = scmp.eq.s32.totalorder %s34, 3
      %p310 = por %p308, %p309
      %p311 = scmp.ne.s32.totalorder %s300, %s301
      %p312 = scmp.eq.s32.totalorder %s34, 0
      %p313 = por %p311, %p312
      %p314 = scmp.ne.s32.totalorder %s300, %s301
      %p315 = scmp.eq.s32.totalorder %s35, 3
      %p316 = por %p314, %p315
      %p318 = scmp.ne.s32.totalorder %s301, %s317
      %p319 = scmp.eq.s32.totalorder %s35, 0
      %p320 = por %p318, %p319
      %s322 = sadd.s32 %s321, 1
      %p325 = scmp.eq.s32.totalorder %s29, 3
      %p326 = scmp.ne.s32.totalorder %s321, %s323
      %p327 = scmp.eq.s32.totalorder %s29, 0
      %p328 = por %p326, %p327
      %p329 = scmp.ne.s32.totalorder %s321, %s323
      %p330 = scmp.eq.s32.totalorder %s34, 3
      %p331 = por %p329, %p330
      %p332 = scmp.ne.s32.totalorder %s323, %s324
      %p333 = scmp.eq.s32.totalorder %s34, 0
      %p334 = por %p332, %p333
      %p335 = scmp.ne.s32.totalorder %s323, %s324
      %p336 = scmp.eq.s32.totalorder %s35, 3
      %p337 = por %p335, %p336
      %p339 = scmp.ne.s32.totalorder %s324, %s338
      %p340 = scmp.eq.s32.totalorder %s35, 0
      %p341 = por %p339, %p340
      %s342 = ssub.s32 %s36, %s48
      %p343 = scmp.eq.s32.totalorder %s342, 0
      %s345 = sadd.s32 %s344, 1
      %s346 = scalar_select %p343, %s344, %s345
      %p349 = pneg %p343
      %p350 = scmp.eq.s32.totalorder %s29, 3
      %p351 = por %p349, %p350
      %p352 = scmp.ne.s32.totalorder %s344, %s347
      %p353 = scmp.eq.s32.totalorder %s29, 0
      %p354 = por %p352, %p353
      %p355 = scmp.ne.s32.totalorder %s344, %s347
      %p356 = scmp.eq.s32.totalorder %s34, 3
      %p357 = por %p355, %p356
      %p358 = scmp.ne.s32.totalorder %s347, %s348
      %p359 = scmp.eq.s32.totalorder %s34, 0
      %p360 = por %p358, %p359
      %p361 = scmp.ne.s32.totalorder %s347, %s348
      %p362 = scmp.eq.s32.totalorder %s35, 3
      %p363 = por %p361, %p362
      %p365 = scmp.ne.s32.totalorder %s348, %s364
      %p366 = scmp.eq.s32.totalorder %s35, 0
      %p367 = por %p365, %p366
      %p368 = scmp.le.s32.totalorder 1, %s29
      %p369 = scmp.lt.s32.totalorder %s29, 5
      %p370 = pnand %p368, %p369
      %p371 = pneg %p370
      // Predicated region
      $region9: #{tpu_custom_call.1} parent=5 // pred_check
        _
      $region10: #{tpu_custom_call.1} parent=5 // pred_check_branch
        %373 = sbr.rel (%p370) target = $region12
      $region11: #{tpu_custom_call.1} parent=5 // pred_region
        %s374 = ssub.s32 %s29, 1
        // Predicated region
        $region13: #{tpu_custom_call.1} parent=11 // pred_check
          %p375 = pneg %p88
        $region14: #{tpu_custom_call.1} parent=11 // pred_check_branch
          %377 = sbr.rel (%p375) target = $region16
        $region15: #{tpu_custom_call.1} parent=11 // pred_region
          %379 = vsyncadd [#allocation9], 0
          %s381 = sshll.u32 %s1, 4
          %s382 = int_to_ptr.hbm [resolvable:$true] %s381
          %s383 = sshll.u32 [#allocation8], 4
          %s384 = int_to_ptr.vmem [resolvable:$true] %s383
          %386 = dma.hbm_to_vmem [thread:$0]  %s382, 16, %s384, [#allocation9]
        $region16: #{tpu_custom_call.1} parent=11 // pred_fallthru
          _
        // Predicated region
        $region17: #{tpu_custom_call.1} parent=11 // pred_check
          %p387 = pneg %p109
        $region18: #{tpu_custom_call.1} parent=11 // pred_check_branch
          %389 = sbr.rel (%p387) target = $region20
        $region19: #{tpu_custom_call.1} parent=11 // pred_region
          %391 = vsyncadd [#allocation9], 0
          %s393 = sshll.u32 %s2, 4
          %s394 = int_to_ptr.hbm [resolvable:$true] %s393
          %s395 = sshll.u32 [#allocation10], 4
          %s396 = int_to_ptr.vmem [resolvable:$true] %s395
          %398 = dma.hbm_to_vmem [thread:$0]  %s394, 16, %s396, [#allocation9]
        $region20: #{tpu_custom_call.1} parent=11 // pred_fallthru
          _
        // Predicated region
        $region21: #{tpu_custom_call.1} parent=11 // pred_check
          %p399 = pneg %p130
        $region22: #{tpu_custom_call.1} parent=11 // pred_check_branch
          %401 = sbr.rel (%p399) target = $region24
        $region23: #{tpu_custom_call.1} parent=11 // pred_region
          %403 = vsyncadd [#allocation12], 0
          %s404 = sshll.u32 %s3, 4
          %s405 = int_to_ptr.hbm [resolvable:$true] %s404
          %s406 = sshll.u32 [#allocation11], 4
          %s407 = int_to_ptr.vmem [resolvable:$true] %s406
          %412 = dma.hbm_to_vmem [thread:$0]  %s405, 3072, %s407, [#allocation12], 192, 192, 12
        $region24: #{tpu_custom_call.1} parent=11 // pred_fallthru
          _
        // Predicated region
        $region25: #{tpu_custom_call.1} parent=11 // pred_check
          %p413 = pneg %p151
        $region26: #{tpu_custom_call.1} parent=11 // pred_check_branch
          %415 = sbr.rel (%p413) target = $region28
        $region27: #{tpu_custom_call.1} parent=11 // pred_region
          _
        $region28: #{tpu_custom_call.1} parent=11 // pred_fallthru
          _
        // Predicated region
        $region29: #{tpu_custom_call.1} parent=11 // pred_check
          %p416 = pneg %p172
        $region30: #{tpu_custom_call.1} parent=11 // pred_check_branch
          %418 = sbr.rel (%p416) target = $region32
        $region31: #{tpu_custom_call.1} parent=11 // pred_region
          %420 = vsyncadd [#allocation12], 0
          %s421 = sshll.u32 %s5, 4
          %s422 = int_to_ptr.hbm [resolvable:$true] %s421
          %s423 = sshll.u32 [#allocation13], 4
          %s424 = int_to_ptr.vmem [resolvable:$true] %s423
          %429 = dma.hbm_to_vmem [thread:$0]  %s422, 1024, %s424, [#allocation12], 64, 64, 4
        $region32: #{tpu_custom_call.1} parent=11 // pred_fallthru
          _
        // Predicated region
        $region33: #{tpu_custom_call.1} parent=11 // pred_check
          %p430 = pneg %p193
        $region34: #{tpu_custom_call.1} parent=11 // pred_check_branch
          %432 = sbr.rel (%p430) target = $region36
        $region35: #{tpu_custom_call.1} parent=11 // pred_region
          %434 = vsyncadd [#allocation15], 0
          %s436 = sshll.u32 %s6, 4
          %s437 = int_to_ptr.hbm [resolvable:$true] %s436
          %s438 = sshll.u32 [#allocation14], 4
          %s439 = int_to_ptr.vmem [resolvable:$true] %s438
          %441 = dma.hbm_to_vmem [thread:$0]  %s437, 16, %s439, [#allocation15]
        $region36: #{tpu_custom_call.1} parent=11 // pred_fallthru
          _
        // Predicated region
        $region37: #{tpu_custom_call.1} parent=11 // pred_check
          %p442 = pneg %p214
        $region38: #{tpu_custom_call.1} parent=11 // pred_check_branch
          %444 = sbr.rel (%p442) target = $region40
        $region39: #{tpu_custom_call.1} parent=11 // pred_region
          %446 = vsyncadd [#allocation15], 0
          %s448 = sshll.u32 %s7, 4
          %s449 = int_to_ptr.hbm [resolvable:$true] %s448
          %s450 = sshll.u32 [#allocation16], 4
          %s451 = int_to_ptr.vmem [resolvable:$true] %s450
          %453 = dma.hbm_to_vmem [thread:$0]  %s449, 16, %s451, [#allocation15]
        $region40: #{tpu_custom_call.1} parent=11 // pred_fallthru
          _
        // Predicated region
        $region41: #{tpu_custom_call.1} parent=11 // pred_check
          %p454 = pneg %p235
        $region42: #{tpu_custom_call.1} parent=11 // pred_check_branch
          %456 = sbr.rel (%p454) target = $region44
        $region43: #{tpu_custom_call.1} parent=11 // pred_region
          %458 = vsyncadd [#allocation18], 0
          %s460 = sshll.u32 %s8, 4
          %s461 = int_to_ptr.hbm [resolvable:$true] %s460
          %s462 = sshll.u32 [#allocation17], 4
          %s463 = int_to_ptr.vmem [resolvable:$true] %s462
          %465 = dma.hbm_to_vmem [thread:$0]  %s461, 16, %s463, [#allocation18]
        $region44: #{tpu_custom_call.1} parent=11 // pred_fallthru
          _
        // Predicated region
        $region45: #{tpu_custom_call.1} parent=11 // pred_check
          %p466 = pneg %p334
        $region46: #{tpu_custom_call.1} parent=11 // pred_check_branch
          %468 = sbr.rel (%p466) target = $region48
        $region47: #{tpu_custom_call.1} parent=11 // pred_region
          _
        $region48: #{tpu_custom_call.1} parent=11 // pred_fallthru
          _
      $region12: #{tpu_custom_call.1} parent=5 // pred_fallthru
        _
      %p469 = scmp.lt.s32.totalorder %s29, 4
      // Predicated region
      $region49: #{tpu_custom_call.1} parent=5 // pred_check
        %p470 = pneg %p469
      $region50: #{tpu_custom_call.1} parent=5 // pred_check_branch
        %472 = sbr.rel (%p470) target = $region52
      $region51: #{tpu_custom_call.1} parent=5 // pred_region
        // Predicated region
        $region53: #{tpu_custom_call.1} parent=51 // pred_check
          %p473 = pneg %p61
        $region54: #{tpu_custom_call.1} parent=51 // pred_check_branch
          %475 = sbr.rel (%p473) target = $region56
        $region55: #{tpu_custom_call.1} parent=51 // pred_region
          %s476 = sand.u32 %s29, 1
          %s477 = scalar_lea.sflag [#allocation6], %s476
          %s478 = sand.u32 %s51, 1
          %s479 = smul.addr %s478, 16
          %s480 = scalar_lea.vmem [#allocation5], %s479
          %482 = vsyncadd %s477, 0
          %s483 = smul.addr %s36, 2
          %s484 = smul.addr %s483, 8
          %s485 = scalar_lea.hbm %s0, %s484
          %s486 = sshll.u32 %s485, 4
          %s487 = int_to_ptr.hbm [resolvable:$true] %s486
          %s488 = sshll.u32 %s480, 4
          %s489 = int_to_ptr.vmem [resolvable:$true] %s488
          %494 = dma.hbm_to_vmem [thread:$0]  %s487, 256, %s489, %s477, 128, 128, 8
        $region56: #{tpu_custom_call.1} parent=51 // pred_fallthru
          _
        // Predicated region
        $region57: #{tpu_custom_call.1} parent=51 // pred_check
          %p495 = pneg %p255
        $region58: #{tpu_custom_call.1} parent=51 // pred_check_branch
          %497 = sbr.rel (%p495) target = $region60
        $region59: #{tpu_custom_call.1} parent=51 // pred_region
          %s498 = sand.u32 %s29, 1
          %s499 = scalar_lea.sflag [#allocation6], %s498
          %s500 = sand.u32 %s245, 1
          %s501 = smul.addr %s500, 128
          %s502 = scalar_lea.vmem [#allocation19], %s501
          %s503 = smul.u32 2, %s37
          %505 = vsyncadd %s499, 0
          %s506 = smul.addr %s503, 4
          %s507 = scalar_lea.hbm %s9, %s506
          %s508 = sshll.u32 %s507, 4
          %s509 = int_to_ptr.hbm [resolvable:$true] %s508
          %s510 = sshll.u32 %s502, 4
          %s511 = int_to_ptr.vmem [resolvable:$true] %s510
          %516 = dma.hbm_to_vmem [thread:$0]  %s509, 2048, %s511, %s499, 256, 128, 8
        $region60: #{tpu_custom_call.1} parent=51 // pred_fallthru
          _
        // Predicated region
        $region61: #{tpu_custom_call.1} parent=51 // pred_check
          %p517 = pneg %p281
        $region62: #{tpu_custom_call.1} parent=51 // pred_check_branch
          %519 = sbr.rel (%p517) target = $region64
        $region63: #{tpu_custom_call.1} parent=51 // pred_region
          %s520 = smul.u32 2, %s37
          %p521 = scmp.lt.s32.totalorder %s520, 3
          %s522 = scalar_select %p521, %s520, 3
          %s523 = scalar_lea.vmem %s10, %s522
          %s524 = smul.u32 2, %s37
        $region64: #{tpu_custom_call.1} parent=51 // pred_fallthru
          _
        // Predicated region
        $region65: #{tpu_custom_call.1} parent=51 // pred_check
          %p525 = pneg %p307
        $region66: #{tpu_custom_call.1} parent=51 // pred_check_branch
          %527 = sbr.rel (%p525) target = $region68
        $region67: #{tpu_custom_call.1} parent=51 // pred_region
          %s528 = sand.u32 %s29, 1
          %s529 = scalar_lea.sflag [#allocation6], %s528
          %s530 = sand.u32 %s297, 1
          %s531 = smul.addr %s530, 128
          %s532 = scalar_lea.vmem [#allocation20], %s531
          %s533 = smul.u32 32, %s37
          %535 = vsyncadd %s529, 0
          %s536 = smul.addr %s533, 4
          %s537 = scalar_lea.hbm %s11, %s536
          %s538 = sshll.u32 %s537, 4
          %s539 = int_to_ptr.hbm [resolvable:$true] %s538
          %s540 = sshll.u32 %s532, 4
          %s541 = int_to_ptr.vmem [resolvable:$true] %s540
          %546 = dma.hbm_to_vmem [thread:$0]  %s539, 2048, %s541, %s529, 64, 64, 4
        $region68: #{tpu_custom_call.1} parent=51 // pred_fallthru
          _
      $region52: #{tpu_custom_call.1} parent=5 // pred_fallthru
        _
      %p547 = scmp.le.s32.totalorder 1, %s29
      %p548 = scmp.lt.s32.totalorder %s29, 5
      %p549 = pnand %p547, %p548
      %p550 = pneg %p549
      // Predicated region
      $region69: #{tpu_custom_call.1} parent=5 // pred_check
        _
      $region70: #{tpu_custom_call.1} parent=5 // pred_check_branch
        %552 = sbr.rel (%p549) target = $region72
      $region71: #{tpu_custom_call.1} parent=5 // pred_region
        %s553 = ssub.s32 %s29, 1
        %s554 = sand.u32 %s34, 1
        %s555 = scalar_lea.sflag [#allocation6], %s554
        %s556 = sand.u32 %s54, 1
        %s557 = smul.addr %s556, 16
        %s558 = scalar_lea.vmem [#allocation5], %s557
        // Predicated region
        $region73: #{tpu_custom_call.1} parent=71 // pred_check
          %p559 = pneg %p67
        $region74: #{tpu_custom_call.1} parent=71 // pred_check_branch
          %561 = sbr.rel (%p559) target = $region76
        $region75: #{tpu_custom_call.1} parent=71 // pred_region
          %563 = dma.done %s555, 256
        $region76: #{tpu_custom_call.1} parent=71 // pred_fallthru
          _
        // Predicated region
        $region77: #{tpu_custom_call.1} parent=71 // pred_check
          %p564 = pneg %p88
        $region78: #{tpu_custom_call.1} parent=71 // pred_check_branch
          %566 = sbr.rel (%p564) target = $region80
        $region79: #{tpu_custom_call.1} parent=71 // pred_region
          %568 = dma.done [#allocation9], 16
        $region80: #{tpu_custom_call.1} parent=71 // pred_fallthru
          _
        // Predicated region
        $region81: #{tpu_custom_call.1} parent=71 // pred_check
          %p569 = pneg %p109
        $region82: #{tpu_custom_call.1} parent=71 // pred_check_branch
          %571 = sbr.rel (%p569) target = $region84
        $region83: #{tpu_custom_call.1} parent=71 // pred_region
          %573 = dma.done [#allocation9], 16
        $region84: #{tpu_custom_call.1} parent=71 // pred_fallthru
          _
        // Predicated region
        $region85: #{tpu_custom_call.1} parent=71 // pred_check
          %p574 = pneg %p130
        $region86: #{tpu_custom_call.1} parent=71 // pred_check_branch
          %576 = sbr.rel (%p574) target = $region88
        $region87: #{tpu_custom_call.1} parent=71 // pred_region
          %578 = dma.done [#allocation12], 3072
        $region88: #{tpu_custom_call.1} parent=71 // pred_fallthru
          _
        // Predicated region
        $region89: #{tpu_custom_call.1} parent=71 // pred_check
          %p579 = pneg %p172
        $region90: #{tpu_custom_call.1} parent=71 // pred_check_branch
          %581 = sbr.rel (%p579) target = $region92
        $region91: #{tpu_custom_call.1} parent=71 // pred_region
          %583 = dma.done [#allocation12], 1024
        $region92: #{tpu_custom_call.1} parent=71 // pred_fallthru
          _
        // Predicated region
        $region93: #{tpu_custom_call.1} parent=71 // pred_check
          %p584 = pneg %p193
        $region94: #{tpu_custom_call.1} parent=71 // pred_check_branch
          %586 = sbr.rel (%p584) target = $region96
        $region95: #{tpu_custom_call.1} parent=71 // pred_region
          %588 = dma.done [#allocation15], 16
        $region96: #{tpu_custom_call.1} parent=71 // pred_fallthru
          _
        // Predicated region
        $region97: #{tpu_custom_call.1} parent=71 // pred_check
          %p589 = pneg %p214
        $region98: #{tpu_custom_call.1} parent=71 // pred_check_branch
          %591 = sbr.rel (%p589) target = $region100
        $region99: #{tpu_custom_call.1} parent=71 // pred_region
          %593 = dma.done [#allocation15], 16
        $region100: #{tpu_custom_call.1} parent=71 // pred_fallthru
          _
        // Predicated region
        $region101: #{tpu_custom_call.1} parent=71 // pred_check
          %p594 = pneg %p235
        $region102: #{tpu_custom_call.1} parent=71 // pred_check_branch
          %596 = sbr.rel (%p594) target = $region104
        $region103: #{tpu_custom_call.1} parent=71 // pred_region
          %598 = dma.done [#allocation18], 16
        $region104: #{tpu_custom_call.1} parent=71 // pred_fallthru
          _
        %s599 = sand.u32 %s34, 1
        %s600 = scalar_lea.sflag [#allocation6], %s599
        %s601 = sand.u32 %s248, 1
        %s602 = smul.addr %s601, 128
        %s603 = scalar_lea.vmem [#allocation19], %s602
        // Predicated region
        $region105: #{tpu_custom_call.1} parent=71 // pred_check
          %p604 = pneg %p261
        $region106: #{tpu_custom_call.1} parent=71 // pred_check_branch
          %606 = sbr.rel (%p604) target = $region108
        $region107: #{tpu_custom_call.1} parent=71 // pred_region
          %608 = dma.done %s600, 2048
        $region108: #{tpu_custom_call.1} parent=71 // pred_fallthru
          _
        %s609 = sand.u32 %s34, 1
        %s610 = scalar_lea.sflag [#allocation6], %s609
        %s611 = sand.u32 %s300, 1
        %s612 = smul.addr %s611, 128
        %s613 = scalar_lea.vmem [#allocation20], %s612
        // Predicated region
        $region109: #{tpu_custom_call.1} parent=71 // pred_check
          %p614 = pneg %p313
        $region110: #{tpu_custom_call.1} parent=71 // pred_check_branch
          %616 = sbr.rel (%p614) target = $region112
        $region111: #{tpu_custom_call.1} parent=71 // pred_region
          %618 = dma.done %s610, 2048
        $region112: #{tpu_custom_call.1} parent=71 // pred_fallthru
          _
        %s619 = sand.u32 %s34, 1
        %s620 = scalar_lea.sflag [#allocation6], %s619
        %s621 = sand.u32 %s54, 1
        %s622 = smul.addr %s621, 16
        %s623 = scalar_lea.vmem [#allocation5], %s622
        %p624 = pneg %p67
        %p625 = pneg %p64
        %p626 = pneg %p88
        %p627 = pneg %p85
        %p628 = pneg %p109
        %p629 = pneg %p106
        %p630 = pneg %p130
        %p631 = pneg %p127
        %p632 = pneg %p151
        %p633 = pneg %p148
        %p634 = pneg %p172
        %p635 = pneg %p169
        %p636 = pneg %p193
        %p637 = pneg %p190
        %p638 = pneg %p214
        %p639 = pneg %p211
        %p640 = pneg %p235
        %p641 = pneg %p232
        %s642 = sand.u32 %s34, 1
        %s643 = scalar_lea.sflag [#allocation6], %s642
        %s644 = sand.u32 %s248, 1
        %s645 = smul.addr %s644, 128
        %s646 = scalar_lea.vmem [#allocation19], %s645
        %p647 = pneg %p261
        %p648 = pneg %p258
        %s649 = smul.u32 2, %s39
        %p650 = scmp.lt.s32.totalorder %s649, 3
        %s651 = scalar_select %p650, %s649, 3
        %s652 = scalar_lea.vmem %s10, %s651
        %p653 = pneg %p287
        %p654 = pneg %p284
        %s655 = sand.u32 %s34, 1
        %s656 = scalar_lea.sflag [#allocation6], %s655
        %s657 = sand.u32 %s300, 1
        %s658 = smul.addr %s657, 128
        %s659 = scalar_lea.vmem [#allocation20], %s658
        %p660 = pneg %p313
        %p661 = pneg %p310
        %p662 = pneg %p334
        %p663 = pneg %p331
        %p664 = pneg %p360
        %p665 = pneg %p357
        %s666 = sand.u32 %s347, 1
        %s667 = scalar_lea.sflag [#allocation7], %s666
        %s668 = sand.u32 %s347, 1
        %s669 = smul.addr %s668, 16
        %s670 = scalar_lea.vmem [#allocation21], %s669
        %s671 = smul.u32 2, %s39
        %s672 = smul.u32 2, %s39
        %p673 = scmp.lt.s32.totalorder %s672, 3
        %s674 = scalar_select %p673, %s672, 3
        %s675 = scalar_lea.vmem %s10, %s674
        %s676 = smul.u32 2, %s39
        %s677 = smul.u32 32, %s39
        %p679 = scmp.eq.s32.totalorder %s39, 0
        // Predicated region
        $region113: #{tpu_custom_call.1} parent=71 // pred_check
          %p680 = pneg %p679
        $region114: #{tpu_custom_call.1} parent=71 // pred_check_branch
          %682 = sbr.rel (%p680) target = $region116
        $region115: #{tpu_custom_call.1} parent=71 // pred_region
          %v683 = vld [vmem:[%s558] sm:$0xff]
          %v684 = vld [vmem:[%s558 + $0x8] sm:$0xff]
          %v685 = vld [vmem:[#allocation8] sm:$0x1]
          %v686 = vld [vmem:[#allocation10] sm:$0x1]
          %687 = vadd.xlane.f32.xlu0 %v683
          %v688 = vpop.xlane.xlu0 %687
          %689 = vadd.xlane.f32.xlu0 %v684
          %v690 = vpop.xlane.xlu0 %689
          %v691 = vrcp.pop 128.0
          %v692 = vmul.f32 128.0, %v691
          %v693 = vsub.f32 1.0, %v692
          %v694 = vmul.f32 %v691, %v693
          %v695 = vadd.f32 %v691, %v694
          %vm696 = vweird.f32 %v691
          %v697 = vsel %vm696, %v691, %v695
          %v698 = vmul.f32 %v688, %v697
          %v699 = vmul.f32 %v690, %v697
          %v700 = vsub.f32 %v683, %v698
          %v701 = vsub.f32 %v684, %v699
          %v702 = vmul.f32 %v700, %v700
          %v703 = vmul.f32 %v701, %v701
          %704 = vadd.xlane.f32.xlu0 %v702
          %v705 = vpop.xlane.xlu0 %704
          %706 = vadd.xlane.f32.xlu0 %v703
          %v707 = vpop.xlane.xlu0 %706
          %v708 = vmul.f32 %v705, %v697
          %v709 = vmul.f32 %v707, %v697
          %v710 = vadd.f32 %v708, 1e-05
          %v711 = vadd.f32 %v709, 1e-05
          %v712 = vrsqrt.pop %v710
          %v713 = vmul.f32 %v712, %v710
          %v714 = vmul.f32 %v713, %v712
          %v715 = vmul.f32 0.5, %v714
          %v716 = vsub.f32 1.5, %v715
          %v717 = vmul.f32 %v712, %v716
          %vm718 = vweird.f32 %v710
          %vm719 = vweird.f32 %v712
          %vm720 = vmor %vm718, %vm719
          %v721 = vsel %vm720, %v712, %v717
          %v722 = vrsqrt.pop %v711
          %v723 = vmul.f32 %v722, %v711
          %v724 = vmul.f32 %v723, %v722
          %v725 = vmul.f32 0.5, %v724
          %v726 = vsub.f32 1.5, %v725
          %v727 = vmul.f32 %v722, %v726
          %vm728 = vweird.f32 %v711
          %vm729 = vweird.f32 %v722
          %vm730 = vmor %vm728, %vm729
          %v731 = vsel %vm730, %v722, %v727
          %v732 = vmul.f32 %v700, %v721
          %v733 = vmul.f32 %v701, %v731
          %v735 = vperm.slane %v685, 0
          %v737 = vmul.f32 %v732, %v735
          %v738 = vmul.f32 %v733, %v735
          %v740 = vperm.slane %v686, 0
          %v742 = vadd.f32 %v737, %v740
          %v743 = vadd.f32 %v738, %v740
          %v744 = vpack.c.bf16 %v743, %v742
          %v745 = vld [vmem:[#allocation11] sm:$0xff]
          %v746 = vld [vmem:[#allocation11 + $0x8] sm:$0xf]
          %v747 = vld [vmem:[#allocation11 + $0xc] sm:$0xff]
          %v748 = vld [vmem:[#allocation11 + $0x14] sm:$0xf]
          %v749 = vld [vmem:[#allocation11 + $0x18] sm:$0xff]
          %v750 = vld [vmem:[#allocation11 + $0x20] sm:$0xf]
          %v751 = vld [vmem:[#allocation11 + $0x24] sm:$0xff]
          %v752 = vld [vmem:[#allocation11 + $0x2c] sm:$0xf]
          %v753 = vld [vmem:[#allocation11 + $0x30] sm:$0xff]
          %v754 = vld [vmem:[#allocation11 + $0x38] sm:$0xf]
          %v755 = vld [vmem:[#allocation11 + $0x3c] sm:$0xff]
          %v756 = vld [vmem:[#allocation11 + $0x44] sm:$0xf]
          %v757 = vld [vmem:[#allocation11 + $0x48] sm:$0xff]
          %v758 = vld [vmem:[#allocation11 + $0x50] sm:$0xf]
          %v759 = vld [vmem:[#allocation11 + $0x54] sm:$0xff]
          %v760 = vld [vmem:[#allocation11 + $0x5c] sm:$0xf]
          %v761 = vld [vmem:[#allocation11 + $0x60] sm:$0xff]
          %v762 = vld [vmem:[#allocation11 + $0x68] sm:$0xf]
          %v763 = vld [vmem:[#allocation11 + $0x6c] sm:$0xff]
          %v764 = vld [vmem:[#allocation11 + $0x74] sm:$0xf]
          %v765 = vld [vmem:[#allocation11 + $0x78] sm:$0xff]
          %v766 = vld [vmem:[#allocation11 + $0x80] sm:$0xf]
          %v767 = vld [vmem:[#allocation11 + $0x84] sm:$0xff]
          %v768 = vld [vmem:[#allocation11 + $0x8c] sm:$0xf]
          %v769 = vld [vmem:[#allocation11 + $0x90] sm:$0xff]
          %v770 = vld [vmem:[#allocation11 + $0x98] sm:$0xf]
          %v771 = vld [vmem:[#allocation11 + $0x9c] sm:$0xff]
          %v772 = vld [vmem:[#allocation11 + $0xa4] sm:$0xf]
          %v773 = vld [vmem:[#allocation11 + $0xa8] sm:$0xff]
          %v774 = vld [vmem:[#allocation11 + $0xb0] sm:$0xf]
          %v775 = vld [vmem:[#allocation11 + $0xb4] sm:$0xff]
          %v776 = vld [vmem:[#allocation11 + $0xbc] sm:$0xf]
          %v777 = vld [vmem:[%s4] sm:$0x7]
          %v779 = vperm.slane %v777, 0
          %v780 = vperm.slane %v777, 1
          %v781 = vperm.slane %v777, 2
          %v817 = vunpack.c.l.b16 %v745
          %v818 = vunpack.c.h.b16 %v745
          %v819 = vunpack.c.l.b16 %v746
          %v820 = vunpack.c.l.b16 %v747
          %v821 = vunpack.c.h.b16 %v747
          %v822 = vunpack.c.l.b16 %v748
          %v823 = vunpack.c.l.b16 %v749
          %v824 = vunpack.c.h.b16 %v749
          %v825 = vunpack.c.l.b16 %v750
          %v826 = vunpack.c.l.b16 %v751
          %v827 = vunpack.c.h.b16 %v751
          %v828 = vunpack.c.l.b16 %v752
          %v829 = vunpack.c.l.b16 %v753
          %v830 = vunpack.c.h.b16 %v753
          %v831 = vunpack.c.l.b16 %v754
          %v832 = vunpack.c.l.b16 %v755
          %v833 = vunpack.c.h.b16 %v755
          %v834 = vunpack.c.l.b16 %v756
          %v835 = vunpack.c.l.b16 %v757
          %v836 = vunpack.c.h.b16 %v757
          %v837 = vunpack.c.l.b16 %v758
          %v838 = vunpack.c.l.b16 %v759
          %v839 = vunpack.c.h.b16 %v759
          %v840 = vunpack.c.l.b16 %v760
          %v841 = vunpack.c.l.b16 %v761
          %v842 = vunpack.c.h.b16 %v761
          %v843 = vunpack.c.l.b16 %v762
          %v844 = vunpack.c.l.b16 %v763
          %v845 = vunpack.c.h.b16 %v763
          %v846 = vunpack.c.l.b16 %v764
          %v847 = vunpack.c.l.b16 %v765
          %v848 = vunpack.c.h.b16 %v765
          %v849 = vunpack.c.l.b16 %v766
          %v850 = vunpack.c.l.b16 %v767
          %v851 = vunpack.c.h.b16 %v767
          %v852 = vunpack.c.l.b16 %v768
          %v853 = vunpack.c.l.b16 %v769
          %v854 = vunpack.c.h.b16 %v769
          %v855 = vunpack.c.l.b16 %v770
          %v856 = vunpack.c.l.b16 %v771
          %v857 = vunpack.c.h.b16 %v771
          %v858 = vunpack.c.l.b16 %v772
          %v859 = vunpack.c.l.b16 %v773
          %v860 = vunpack.c.h.b16 %v773
          %v861 = vunpack.c.l.b16 %v774
          %v862 = vunpack.c.l.b16 %v775
          %v863 = vunpack.c.h.b16 %v775
          %v864 = vunpack.c.l.b16 %v776
          %v865 = vpack.c.b16 %v820, %v817
          %v866 = vpack.c.b16 %v821, %v818
          %v867 = vpack.c.b16 %v822, %v819
          %v868 = vpack.c.b16 %v826, %v823
          %v869 = vpack.c.b16 %v827, %v824
          %v870 = vpack.c.b16 %v828, %v825
          %v871 = vpack.c.b16 %v832, %v829
          %v872 = vpack.c.b16 %v833, %v830
          %v873 = vpack.c.b16 %v834, %v831
          %v874 = vpack.c.b16 %v838, %v835
          %v875 = vpack.c.b16 %v839, %v836
          %v876 = vpack.c.b16 %v840, %v837
          %v877 = vpack.c.b16 %v844, %v841
          %v878 = vpack.c.b16 %v845, %v842
          %v879 = vpack.c.b16 %v846, %v843
          %v880 = vpack.c.b16 %v850, %v847
          %v881 = vpack.c.b16 %v851, %v848
          %v882 = vpack.c.b16 %v852, %v849
          %v883 = vpack.c.b16 %v856, %v853
          %v884 = vpack.c.b16 %v857, %v854
          %v885 = vpack.c.b16 %v858, %v855
          %v886 = vpack.c.b16 %v862, %v859
          %v887 = vpack.c.b16 %v863, %v860
          %v888 = vpack.c.b16 %v864, %v861
          %913 = vmatpush.bf16.msra.mxu0 %v886
          %914 = vmatpush.bf16.msra.mxu0 %v883
          %915 = vmatpush.bf16.msra.mxu0 %v880
          %916 = vmatpush.bf16.msra.mxu0 %v877
          %917 = vmatpush.bf16.msra.mxu0 %v874
          %918 = vmatpush.bf16.msra.mxu0 %v871
          %919 = vmatpush.bf16.msra.mxu0 %v868
          %920 = vmatpush.bf16.msra.mxu0 %v865
          %921 = vmatmul.bf16.gmra.mxu0 %v744
          %v922 = vpop.f32.mrf.mxu0
          %v923 = vadd.f32 %v779, %v922
          %v924 = vpop.f32.mrf.mxu0
          %v925 = vadd.f32 %v779, %v924
          %926 = vdwg.mxu0
          %927 = vmatpush.bf16.msra.mxu0 %v887
          %928 = vmatpush.bf16.msra.mxu0 %v884
          %929 = vmatpush.bf16.msra.mxu0 %v881
          %930 = vmatpush.bf16.msra.mxu0 %v878
          %931 = vmatpush.bf16.msra.mxu0 %v875
          %932 = vmatpush.bf16.msra.mxu0 %v872
          %933 = vmatpush.bf16.msra.mxu0 %v869
          %934 = vmatpush.bf16.msra.mxu0 %v866
          %935 = vmatmul.bf16.gmra.mxu0 %v744
          %v936 = vpop.f32.mrf.mxu0
          %v937 = vadd.f32 %v780, %v936
          %v938 = vpop.f32.mrf.mxu0
          %v939 = vadd.f32 %v780, %v938
          %940 = vdwg.mxu0
          %941 = vmatpush.bf16.msra.mxu0 %v888
          %942 = vmatpush.bf16.msra.mxu0 %v885
          %943 = vmatpush.bf16.msra.mxu0 %v882
          %944 = vmatpush.bf16.msra.mxu0 %v879
          %945 = vmatpush.bf16.msra.mxu0 %v876
          %946 = vmatpush.bf16.msra.mxu0 %v873
          %947 = vmatpush.bf16.msra.mxu0 %v870
          %948 = vmatpush.bf16.msra.mxu0 %v867
          %949 = vmatmul.bf16.gmra.mxu0 %v744
          %v950 = vpop.f32.mrf.mxu0
          %v951 = vadd.f32 %v781, %v950
          %v952 = vpop.f32.mrf.mxu0
          %v953 = vadd.f32 %v781, %v952
          %954 = vdwg.mxu0
          %v955 = vld [vmem:[#allocation14] sm:$0x1]
          %v957 = vperm.slane %v955, 0
          %v959 = vadd.f32 %v957, 0.0
          %v960 = vpack.c.bf16 %v925, %v923
          %961 = vxpose.xlu0.b32.start [1/16] %v937, 128
          %962 = vxpose.xlu0.b32.cont [2/16] %v939, 128
          %963 = vxpose.xlu0.b32.cont [3/16] 0.0, 128
          %964 = vxpose.xlu0.b32.cont [4/16] 0.0, 128
          %965 = vxpose.xlu0.b32.cont [5/16] 0.0, 128
          %966 = vxpose.xlu0.b32.cont [6/16] 0.0, 128
          %967 = vxpose.xlu0.b32.cont [7/16] 0.0, 128
          %968 = vxpose.xlu0.b32.cont [8/16] 0.0, 128
          %969 = vxpose.xlu0.b32.cont [9/16] 0.0, 128
          %970 = vxpose.xlu0.b32.cont [10/16] 0.0, 128
          %971 = vxpose.xlu0.b32.cont [11/16] 0.0, 128
          %972 = vxpose.xlu0.b32.cont [12/16] 0.0, 128
          %973 = vxpose.xlu0.b32.cont [13/16] 0.0, 128
          %974 = vxpose.xlu0.b32.cont [14/16] 0.0, 128
          %975 = vxpose.xlu0.b32.cont [15/16] 0.0, 128
          %976 = vxpose.xlu0.b32.end [16/16] 0.0, 128
          %v977 = vpop.trf.xlu0
          %v978 = vpop.trf.xlu0
          %v979 = vpop.trf.xlu0
          %v980 = vpop.trf.xlu0
          %v981 = vpop.trf.xlu0
          %v982 = vpop.trf.xlu0
          %v983 = vpop.trf.xlu0
          %v984 = vpop.trf.xlu0
          %v985 = vpop.trf.xlu0
          %v986 = vpop.trf.xlu0
          %v987 = vpop.trf.xlu0
          %v988 = vpop.trf.xlu0
          %v989 = vpop.trf.xlu0
          %v990 = vpop.trf.xlu0
          %v991 = vpop.trf.xlu0
          %v992 = vpop.trf.xlu0
          %v993 = vpack.c.bf16 %v978, %v977
          %v994 = vpack.c.bf16 %v980, %v979
          %v995 = vpack.c.bf16 %v953, %v951
          %vm996 = vcmask 261120
          %v998 = vsel %vm996, %v960, 0
          %1000 = vmatpush.bf16.msra.mxu0 0
          %1001 = vmatpush.bf16.msra.mxu0 0
          %1002 = vmatpush.bf16.msra.mxu0 0
          %1003 = vmatpush.bf16.msra.mxu0 0
          %1004 = vmatpush.bf16.msra.mxu0 0
          %1005 = vmatpush.bf16.msra.mxu0 0
          %1006 = vmatpush.bf16.msra.mxu0 %v994
          %1007 = vmatpush.bf16.msra.mxu0 %v993
          %1008 = vmatmul.bf16.gmra.mxu0 %v998
          %v1009 = vpop.f32.mrf.mxu0
          %v1010 = vadd.f32 0.0, %v1009
          %v1011 = vpop.f32.mrf.mxu0
          %v1012 = vadd.f32 0.0, %v1011
          %1013 = vdwg.mxu0
          %vm1014 = vcmask 130048
          %v1015 = vsel %vm1014, %v1010, -inf
          %1016 = vmax.xlane.f32.xlu0 %v1015
          %v1017 = vpop.xlane.xlu0 %1016
          %v1018 = vsel %vm1014, %v1012, -inf
          %1019 = vmax.xlane.f32.xlu0 %v1018
          %v1020 = vpop.xlane.xlu0 %1019
          %v1021 = vsub.f32 %v1010, %v1017
          %v1022 = vsub.f32 %v1012, %v1020
          %v1023 = vmul.f32 %v1021, 1.442695
          %v1024 = vpow.pop %v1023
          %v1025 = vmul.f32 %v1022, 1.442695
          %v1026 = vpow.pop %v1025
          %v1027 = vsel %vm1014, %v1024, 0.0
          %1028 = vadd.xlane.f32.xlu0 %v1027
          %v1029 = vpop.xlane.xlu0 %1028
          %v1030 = vsel %vm1014, %v1026, 0.0
          %1031 = vadd.xlane.f32.xlu0 %v1030
          %v1032 = vpop.xlane.xlu0 %1031
          %v1033 = vrcp.pop %v1029
          %v1034 = vrcp.pop %v1032
          %v1035 = vmul.f32 %v1024, %v1033
          %v1036 = vmul.f32 %v1026, %v1034
          %v1037 = vpack.c.bf16 %v1036, %v1035
          %v1039 = vsel %vm1014, %v1037, 0
          %1041 = vmatpush.bf16.msra.mxu0 0
          %1042 = vmatpush.bf16.msra.mxu0 0
          %1043 = vmatpush.bf16.msra.mxu0 0
          %1044 = vmatpush.bf16.msra.mxu0 0
          %1045 = vmatpush.bf16.msra.mxu0 0
          %1046 = vmatpush.bf16.msra.mxu0 0
          %1047 = vmatpush.bf16.msra.mxu0 0
          %1048 = vmatpush.bf16.msra.mxu0 %v995
          %1049 = vmatmul.bf16.gmra.mxu0 %v1039
          %v1050 = vpop.f32.mrf.mxu0
          %v1051 = vadd.f32 0.0, %v1050
          %v1052 = vpop.f32.mrf.mxu0
          %v1053 = vadd.f32 0.0, %v1052
          %1054 = vdwg.mxu0
          %v1055 = vpack.c.bf16 %v1053, %v1051
          %v1056 = vld [vmem:[#allocation13] sm:$0xf]
          %v1057 = vld [vmem:[#allocation13 + $0x4] sm:$0xf]
          %v1058 = vld [vmem:[#allocation13 + $0x8] sm:$0xf]
          %v1059 = vld [vmem:[#allocation13 + $0xc] sm:$0xf]
          %v1064 = vunpack.c.l.b16 %v1056
          %v1065 = vunpack.c.l.b16 %v1057
          %v1066 = vunpack.c.l.b16 %v1058
          %v1067 = vunpack.c.l.b16 %v1059
          %v1068 = vpack.c.b16 %v1065, %v1064
          %v1069 = vpack.c.b16 %v1067, %v1066
          %v1073 = vsel %vm996, %v1055, 0
          %1075 = vmatpush.bf16.msra.mxu0 0
          %1076 = vmatpush.bf16.msra.mxu0 0
          %1077 = vmatpush.bf16.msra.mxu0 0
          %1078 = vmatpush.bf16.msra.mxu0 0
          %1079 = vmatpush.bf16.msra.mxu0 0
          %1080 = vmatpush.bf16.msra.mxu0 0
          %1081 = vmatpush.bf16.msra.mxu0 %v1069
          %1082 = vmatpush.bf16.msra.mxu0 %v1068
          %1083 = vmatmul.bf16.gmra.mxu0 %v1073
          %v1084 = vpop.f32.mrf.mxu0
          %v1085 = vadd.f32 0.0, %v1084
          %v1086 = vpop.f32.mrf.mxu0
          %v1087 = vadd.f32 0.0, %v1086
          %1088 = vdwg.mxu0
          %v1089 = vadd.f32 %v959, %v1085
          %v1090 = vadd.f32 %v959, %v1087
          %1093 = vrot.lane.b32.xlu0 %v937, 96
          %v1094 = vpop.permute.xlu0 %1093
          %1095 = vrot.lane.b32.xlu0 %v939, 96
          %v1096 = vpop.permute.xlu0 %1095
          %1099 = vxpose.xlu0.b32.start [1/16] %v1094, 128
          %1100 = vxpose.xlu0.b32.cont [2/16] %v1096, 128
          %1101 = vxpose.xlu0.b32.cont [3/16] 0.0, 128
          %1102 = vxpose.xlu0.b32.cont [4/16] 0.0, 128
          %1103 = vxpose.xlu0.b32.cont [5/16] 0.0, 128
          %1104 = vxpose.xlu0.b32.cont [6/16] 0.0, 128
          %1105 = vxpose.xlu0.b32.cont [7/16] 0.0, 128
          %1106 = vxpose.xlu0.b32.cont [8/16] 0.0, 128
          %1107 = vxpose.xlu0.b32.cont [9/16] 0.0, 128
          %1108 = vxpose.xlu0.b32.cont [10/16] 0.0, 128
          %1109 = vxpose.xlu0.b32.cont [11/16] 0.0, 128
          %1110 = vxpose.xlu0.b32.cont [12/16] 0.0, 128
          %1111 = vxpose.xlu0.b32.cont [13/16] 0.0, 128
          %1112 = vxpose.xlu0.b32.cont [14/16] 0.0, 128
          %1113 = vxpose.xlu0.b32.cont [15/16] 0.0, 128
          %1114 = vxpose.xlu0.b32.end [16/16] 0.0, 128
          %v1115 = vpop.trf.xlu0
          %v1116 = vpop.trf.xlu0
          %v1117 = vpop.trf.xlu0
          %v1118 = vpop.trf.xlu0
          %v1119 = vpop.trf.xlu0
          %v1120 = vpop.trf.xlu0
          %v1121 = vpop.trf.xlu0
          %v1122 = vpop.trf.xlu0
          %v1123 = vpop.trf.xlu0
          %v1124 = vpop.trf.xlu0
          %v1125 = vpop.trf.xlu0
          %v1126 = vpop.trf.xlu0
          %v1127 = vpop.trf.xlu0
          %v1128 = vpop.trf.xlu0
          %v1129 = vpop.trf.xlu0
          %v1130 = vpop.trf.xlu0
          %v1131 = vpack.c.bf16 %v1116, %v1115
          %v1132 = vpack.c.bf16 %v1118, %v1117
          %1134 = vrot.lane.b32.xlu0 %v960, 96
          %v1135 = vpop.permute.xlu0 %1134
          %v1137 = vsel %vm996, %v1135, 0
          %1139 = vmatpush.bf16.msra.mxu0 0
          %1140 = vmatpush.bf16.msra.mxu0 0
          %1141 = vmatpush.bf16.msra.mxu0 0
          %1142 = vmatpush.bf16.msra.mxu0 0
          %1143 = vmatpush.bf16.msra.mxu0 0
          %1144 = vmatpush.bf16.msra.mxu0 0
          %1145 = vmatpush.bf16.msra.mxu0 %v1132
          %1146 = vmatpush.bf16.msra.mxu0 %v1131
          %1147 = vmatmul.bf16.gmra.mxu0 %v1137
          %v1148 = vpop.f32.mrf.mxu0
          %v1149 = vadd.f32 0.0, %v1148
          %v1150 = vpop.f32.mrf.mxu0
          %v1151 = vadd.f32 0.0, %v1150
          %1152 = vdwg.mxu0
          %v1153 = vsel %vm1014, %v1149, -inf
          %1154 = vmax.xlane.f32.xlu0 %v1153
          %v1155 = vpop.xlane.xlu0 %1154
          %v1156 = vsel %vm1014, %v1151, -inf
          %1157 = vmax.xlane.f32.xlu0 %v1156
          %v1158 = vpop.xlane.xlu0 %1157
          %v1159 = vsub.f32 %v1149, %v1155
          %v1160 = vsub.f32 %v1151, %v1158
          %v1161 = vmul.f32 %v1159, 1.442695
          %v1162 = vpow.pop %v1161
          %v1163 = vmul.f32 %v1160, 1.442695
          %v1164 = vpow.pop %v1163
          %v1165 = vsel %vm1014, %v1162, 0.0
          %1166 = vadd.xlane.f32.xlu0 %v1165
          %v1167 = vpop.xlane.xlu0 %1166
          %v1168 = vsel %vm1014, %v1164, 0.0
          %1169 = vadd.xlane.f32.xlu0 %v1168
          %v1170 = vpop.xlane.xlu0 %1169
          %v1171 = vrcp.pop %v1167
          %v1172 = vrcp.pop %v1170
          %v1173 = vmul.f32 %v1162, %v1171
          %v1174 = vmul.f32 %v1164, %v1172
          %v1175 = vpack.c.bf16 %v1174, %v1173
          %1177 = vrot.lane.b32.xlu0 %v995, 96
          %v1178 = vpop.permute.xlu0 %1177
          %v1181 = vsel %vm1014, %v1175, 0
          %1183 = vmatpush.bf16.msra.mxu0 0
          %1184 = vmatpush.bf16.msra.mxu0 0
          %1185 = vmatpush.bf16.msra.mxu0 0
          %1186 = vmatpush.bf16.msra.mxu0 0
          %1187 = vmatpush.bf16.msra.mxu0 0
          %1188 = vmatpush.bf16.msra.mxu0 0
          %1189 = vmatpush.bf16.msra.mxu0 0
          %1190 = vmatpush.bf16.msra.mxu0 %v1178
          %1191 = vmatmul.bf16.gmra.mxu0 %v1181
          %v1192 = vpop.f32.mrf.mxu0
          %v1193 = vadd.f32 0.0, %v1192
          %v1194 = vpop.f32.mrf.mxu0
          %v1195 = vadd.f32 0.0, %v1194
          %1196 = vdwg.mxu0
          %v1197 = vpack.c.bf16 %v1195, %v1193
          %v1198 = vld [vmem:[#allocation13 + $0x10] sm:$0xf]
          %v1199 = vld [vmem:[#allocation13 + $0x14] sm:$0xf]
          %v1200 = vld [vmem:[#allocation13 + $0x18] sm:$0xf]
          %v1201 = vld [vmem:[#allocation13 + $0x1c] sm:$0xf]
          %v1206 = vunpack.c.l.b16 %v1198
          %v1207 = vunpack.c.l.b16 %v1199
          %v1208 = vunpack.c.l.b16 %v1200
          %v1209 = vunpack.c.l.b16 %v1201
          %v1210 = vpack.c.b16 %v1207, %v1206
          %v1211 = vpack.c.b16 %v1209, %v1208
          %v1215 = vsel %vm996, %v1197, 0
          %1217 = vmatpush.bf16.msra.mxu0 0
          %1218 = vmatpush.bf16.msra.mxu0 0
          %1219 = vmatpush.bf16.msra.mxu0 0
          %1220 = vmatpush.bf16.msra.mxu0 0
          %1221 = vmatpush.bf16.msra.mxu0 0
          %1222 = vmatpush.bf16.msra.mxu0 0
          %1223 = vmatpush.bf16.msra.mxu0 %v1211
          %1224 = vmatpush.bf16.msra.mxu0 %v1210
          %1225 = vmatmul.bf16.gmra.mxu0 %v1215
          %v1226 = vpop.f32.mrf.mxu0
          %v1227 = vadd.f32 0.0, %v1226
          %v1228 = vpop.f32.mrf.mxu0
          %v1229 = vadd.f32 0.0, %v1228
          %1230 = vdwg.mxu0
          %v1231 = vadd.f32 %v1089, %v1227
          %v1232 = vadd.f32 %v1090, %v1229
          %1233 = vrot.lane.b32.xlu0 %v937, 64
          %v1234 = vpop.permute.xlu0 %1233
          %1235 = vrot.lane.b32.xlu0 %v939, 64
          %v1236 = vpop.permute.xlu0 %1235
          %1239 = vxpose.xlu0.b32.start [1/16] %v1234, 128
          %1240 = vxpose.xlu0.b32.cont [2/16] %v1236, 128
          %1241 = vxpose.xlu0.b32.cont [3/16] 0.0, 128
          %1242 = vxpose.xlu0.b32.cont [4/16] 0.0, 128
          %1243 = vxpose.xlu0.b32.cont [5/16] 0.0, 128
          %1244 = vxpose.xlu0.b32.cont [6/16] 0.0, 128
          %1245 = vxpose.xlu0.b32.cont [7/16] 0.0, 128
          %1246 = vxpose.xlu0.b32.cont [8/16] 0.0, 128
          %1247 = vxpose.xlu0.b32.cont [9/16] 0.0, 128
          %1248 = vxpose.xlu0.b32.cont [10/16] 0.0, 128
          %1249 = vxpose.xlu0.b32.cont [11/16] 0.0, 128
          %1250 = vxpose.xlu0.b32.cont [12/16] 0.0, 128
          %1251 = vxpose.xlu0.b32.cont [13/16] 0.0, 128
          %1252 = vxpose.xlu0.b32.cont [14/16] 0.0, 128
          %1253 = vxpose.xlu0.b32.cont [15/16] 0.0, 128
          %1254 = vxpose.xlu0.b32.end [16/16] 0.0, 128
          %v1255 = vpop.trf.xlu0
          %v1256 = vpop.trf.xlu0
          %v1257 = vpop.trf.xlu0
          %v1258 = vpop.trf.xlu0
          %v1259 = vpop.trf.xlu0
          %v1260 = vpop.trf.xlu0
          %v1261 = vpop.trf.xlu0
          %v1262 = vpop.trf.xlu0
          %v1263 = vpop.trf.xlu0
          %v1264 = vpop.trf.xlu0
          %v1265 = vpop.trf.xlu0
          %v1266 = vpop.trf.xlu0
          %v1267 = vpop.trf.xlu0
          %v1268 = vpop.trf.xlu0
          %v1269 = vpop.trf.xlu0
          %v1270 = vpop.trf.xlu0
          %v1271 = vpack.c.bf16 %v1256, %v1255
          %v1272 = vpack.c.bf16 %v1258, %v1257
          %1273 = vrot.lane.b32.xlu0 %v960, 64
          %v1274 = vpop.permute.xlu0 %1273
          %v1276 = vsel %vm996, %v1274, 0
          %1278 = vmatpush.bf16.msra.mxu0 0
          %1279 = vmatpush.bf16.msra.mxu0 0
          %1280 = vmatpush.bf16.msra.mxu0 0
          %1281 = vmatpush.bf16.msra.mxu0 0
          %1282 = vmatpush.bf16.msra.mxu0 0
          %1283 = vmatpush.bf16.msra.mxu0 0
          %1284 = vmatpush.bf16.msra.mxu0 %v1272
          %1285 = vmatpush.bf16.msra.mxu0 %v1271
          %1286 = vmatmul.bf16.gmra.mxu0 %v1276
          %v1287 = vpop.f32.mrf.mxu0
          %v1288 = vadd.f32 0.0, %v1287
          %v1289 = vpop.f32.mrf.mxu0
          %v1290 = vadd.f32 0.0, %v1289
          %1291 = vdwg.mxu0
          %v1292 = vsel %vm1014, %v1288, -inf
          %1293 = vmax.xlane.f32.xlu0 %v1292
          %v1294 = vpop.xlane.xlu0 %1293
          %v1295 = vsel %vm1014, %v1290, -inf
          %1296 = vmax.xlane.f32.xlu0 %v1295
          %v1297 = vpop.xlane.xlu0 %1296
          %v1298 = vsub.f32 %v1288, %v1294
          %v1299 = vsub.f32 %v1290, %v1297
          %v1300 = vmul.f32 %v1298, 1.442695
          %v1301 = vpow.pop %v1300
          %v1302 = vmul.f32 %v1299, 1.442695
          %v1303 = vpow.pop %v1302
          %v1304 = vsel %vm1014, %v1301, 0.0
          %1305 = vadd.xlane.f32.xlu0 %v1304
          %v1306 = vpop.xlane.xlu0 %1305
          %v1307 = vsel %vm1014, %v1303, 0.0
          %1308 = vadd.xlane.f32.xlu0 %v1307
          %v1309 = vpop.xlane.xlu0 %1308
          %v1310 = vrcp.pop %v1306
          %v1311 = vrcp.pop %v1309
          %v1312 = vmul.f32 %v1301, %v1310
          %v1313 = vmul.f32 %v1303, %v1311
          %v1314 = vpack.c.bf16 %v1313, %v1312
          %1315 = vrot.lane.b32.xlu0 %v995, 64
          %v1316 = vpop.permute.xlu0 %1315
          %v1319 = vsel %vm1014, %v1314, 0
          %1321 = vmatpush.bf16.msra.mxu0 0
          %1322 = vmatpush.bf16.msra.mxu0 0
          %1323 = vmatpush.bf16.msra.mxu0 0
          %1324 = vmatpush.bf16.msra.mxu0 0
          %1325 = vmatpush.bf16.msra.mxu0 0
          %1326 = vmatpush.bf16.msra.mxu0 0
          %1327 = vmatpush.bf16.msra.mxu0 0
          %1328 = vmatpush.bf16.msra.mxu0 %v1316
          %1329 = vmatmul.bf16.gmra.mxu0 %v1319
          %v1330 = vpop.f32.mrf.mxu0
          %v1331 = vadd.f32 0.0, %v1330
          %v1332 = vpop.f32.mrf.mxu0
          %v1333 = vadd.f32 0.0, %v1332
          %1334 = vdwg.mxu0
          %v1335 = vpack.c.bf16 %v1333, %v1331
          %v1336 = vld [vmem:[#allocation13 + $0x20] sm:$0xf]
          %v1337 = vld [vmem:[#allocation13 + $0x24] sm:$0xf]
          %v1338 = vld [vmem:[#allocation13 + $0x28] sm:$0xf]
          %v1339 = vld [vmem:[#allocation13 + $0x2c] sm:$0xf]
          %v1344 = vunpack.c.l.b16 %v1336
          %v1345 = vunpack.c.l.b16 %v1337
          %v1346 = vunpack.c.l.b16 %v1338
          %v1347 = vunpack.c.l.b16 %v1339
          %v1348 = vpack.c.b16 %v1345, %v1344
          %v1349 = vpack.c.b16 %v1347, %v1346
          %v1353 = vsel %vm996, %v1335, 0
          %1355 = vmatpush.bf16.msra.mxu0 0
          %1356 = vmatpush.bf16.msra.mxu0 0
          %1357 = vmatpush.bf16.msra.mxu0 0
          %1358 = vmatpush.bf16.msra.mxu0 0
          %1359 = vmatpush.bf16.msra.mxu0 0
          %1360 = vmatpush.bf16.msra.mxu0 0
          %1361 = vmatpush.bf16.msra.mxu0 %v1349
          %1362 = vmatpush.bf16.msra.mxu0 %v1348
          %1363 = vmatmul.bf16.gmra.mxu0 %v1353
          %v1364 = vpop.f32.mrf.mxu0
          %v1365 = vadd.f32 0.0, %v1364
          %v1366 = vpop.f32.mrf.mxu0
          %v1367 = vadd.f32 0.0, %v1366
          %1368 = vdwg.mxu0
          %v1369 = vadd.f32 %v1231, %v1365
          %v1370 = vadd.f32 %v1232, %v1367
          %1371 = vrot.lane.b32.xlu0 %v937, 32
          %v1372 = vpop.permute.xlu0 %1371
          %1373 = vrot.lane.b32.xlu0 %v939, 32
          %v1374 = vpop.permute.xlu0 %1373
          %1377 = vxpose.xlu0.b32.start [1/16] %v1372, 128
          %1378 = vxpose.xlu0.b32.cont [2/16] %v1374, 128
          %1379 = vxpose.xlu0.b32.cont [3/16] 0.0, 128
          %1380 = vxpose.xlu0.b32.cont [4/16] 0.0, 128
          %1381 = vxpose.xlu0.b32.cont [5/16] 0.0, 128
          %1382 = vxpose.xlu0.b32.cont [6/16] 0.0, 128
          %1383 = vxpose.xlu0.b32.cont [7/16] 0.0, 128
          %1384 = vxpose.xlu0.b32.cont [8/16] 0.0, 128
          %1385 = vxpose.xlu0.b32.cont [9/16] 0.0, 128
          %1386 = vxpose.xlu0.b32.cont [10/16] 0.0, 128
          %1387 = vxpose.xlu0.b32.cont [11/16] 0.0, 128
          %1388 = vxpose.xlu0.b32.cont [12/16] 0.0, 128
          %1389 = vxpose.xlu0.b32.cont [13/16] 0.0, 128
          %1390 = vxpose.xlu0.b32.cont [14/16] 0.0, 128
          %1391 = vxpose.xlu0.b32.cont [15/16] 0.0, 128
          %1392 = vxpose.xlu0.b32.end [16/16] 0.0, 128
          %v1393 = vpop.trf.xlu0
          %v1394 = vpop.trf.xlu0
          %v1395 = vpop.trf.xlu0
          %v1396 = vpop.trf.xlu0
          %v1397 = vpop.trf.xlu0
          %v1398 = vpop.trf.xlu0
          %v1399 = vpop.trf.xlu0
          %v1400 = vpop.trf.xlu0
          %v1401 = vpop.trf.xlu0
          %v1402 = vpop.trf.xlu0
          %v1403 = vpop.trf.xlu0
          %v1404 = vpop.trf.xlu0
          %v1405 = vpop.trf.xlu0
          %v1406 = vpop.trf.xlu0
          %v1407 = vpop.trf.xlu0
          %v1408 = vpop.trf.xlu0
          %v1409 = vpack.c.bf16 %v1394, %v1393
          %v1410 = vpack.c.bf16 %v1396, %v1395
          %1411 = vrot.lane.b32.xlu0 %v960, 32
          %v1412 = vpop.permute.xlu0 %1411
          %v1414 = vsel %vm996, %v1412, 0
          %1416 = vmatpush.bf16.msra.mxu0 0
          %1417 = vmatpush.bf16.msra.mxu0 0
          %1418 = vmatpush.bf16.msra.mxu0 0
          %1419 = vmatpush.bf16.msra.mxu0 0
          %1420 = vmatpush.bf16.msra.mxu0 0
          %1421 = vmatpush.bf16.msra.mxu0 0
          %1422 = vmatpush.bf16.msra.mxu0 %v1410
          %1423 = vmatpush.bf16.msra.mxu0 %v1409
          %1424 = vmatmul.bf16.gmra.mxu0 %v1414
          %v1425 = vpop.f32.mrf.mxu0
          %v1426 = vadd.f32 0.0, %v1425
          %v1427 = vpop.f32.mrf.mxu0
          %v1428 = vadd.f32 0.0, %v1427
          %1429 = vdwg.mxu0
          %v1430 = vsel %vm1014, %v1426, -inf
          %1431 = vmax.xlane.f32.xlu0 %v1430
          %v1432 = vpop.xlane.xlu0 %1431
          %v1433 = vsel %vm1014, %v1428, -inf
          %1434 = vmax.xlane.f32.xlu0 %v1433
          %v1435 = vpop.xlane.xlu0 %1434
          %v1436 = vsub.f32 %v1426, %v1432
          %v1437 = vsub.f32 %v1428, %v1435
          %v1438 = vmul.f32 %v1436, 1.442695
          %v1439 = vpow.pop %v1438
          %v1440 = vmul.f32 %v1437, 1.442695
          %v1441 = vpow.pop %v1440
          %v1442 = vsel %vm1014, %v1439, 0.0
          %1443 = vadd.xlane.f32.xlu0 %v1442
          %v1444 = vpop.xlane.xlu0 %1443
          %v1445 = vsel %vm1014, %v1441, 0.0
          %1446 = vadd.xlane.f32.xlu0 %v1445
          %v1447 = vpop.xlane.xlu0 %1446
          %v1448 = vrcp.pop %v1444
          %v1449 = vrcp.pop %v1447
          %v1450 = vmul.f32 %v1439, %v1448
          %v1451 = vmul.f32 %v1441, %v1449
          %v1452 = vpack.c.bf16 %v1451, %v1450
          %1453 = vrot.lane.b32.xlu0 %v995, 32
          %v1454 = vpop.permute.xlu0 %1453
          %v1457 = vsel %vm1014, %v1452, 0
          %1459 = vmatpush.bf16.msra.mxu0 0
          %1460 = vmatpush.bf16.msra.mxu0 0
          %1461 = vmatpush.bf16.msra.mxu0 0
          %1462 = vmatpush.bf16.msra.mxu0 0
          %1463 = vmatpush.bf16.msra.mxu0 0
          %1464 = vmatpush.bf16.msra.mxu0 0
          %1465 = vmatpush.bf16.msra.mxu0 0
          %1466 = vmatpush.bf16.msra.mxu0 %v1454
          %1467 = vmatmul.bf16.gmra.mxu0 %v1457
          %v1468 = vpop.f32.mrf.mxu0
          %v1469 = vadd.f32 0.0, %v1468
          %v1470 = vpop.f32.mrf.mxu0
          %v1471 = vadd.f32 0.0, %v1470
          %1472 = vdwg.mxu0
          %v1473 = vpack.c.bf16 %v1471, %v1469
          %v1474 = vld [vmem:[#allocation13 + $0x30] sm:$0xf]
          %v1475 = vld [vmem:[#allocation13 + $0x34] sm:$0xf]
          %v1476 = vld [vmem:[#allocation13 + $0x38] sm:$0xf]
          %v1477 = vld [vmem:[#allocation13 + $0x3c] sm:$0xf]
          %v1482 = vunpack.c.l.b16 %v1474
          %v1483 = vunpack.c.l.b16 %v1475
          %v1484 = vunpack.c.l.b16 %v1476
          %v1485 = vunpack.c.l.b16 %v1477
          %v1486 = vpack.c.b16 %v1483, %v1482
          %v1487 = vpack.c.b16 %v1485, %v1484
          %v1491 = vsel %vm996, %v1473, 0
          %1493 = vmatpush.bf16.msra.mxu0 0
          %1494 = vmatpush.bf16.msra.mxu0 0
          %1495 = vmatpush.bf16.msra.mxu0 0
          %1496 = vmatpush.bf16.msra.mxu0 0
          %1497 = vmatpush.bf16.msra.mxu0 0
          %1498 = vmatpush.bf16.msra.mxu0 0
          %1499 = vmatpush.bf16.msra.mxu0 %v1487
          %1500 = vmatpush.bf16.msra.mxu0 %v1486
          %1501 = vmatmul.bf16.gmra.mxu0 %v1491
          %v1502 = vpop.f32.mrf.mxu0
          %v1503 = vadd.f32 0.0, %v1502
          %v1504 = vpop.f32.mrf.mxu0
          %v1505 = vadd.f32 0.0, %v1504
          %1506 = vdwg.mxu0
          %v1507 = vadd.f32 %v1369, %v1503
          %v1508 = vadd.f32 %v1370, %v1505
          %v1509 = vadd.f32 %v683, %v1507
          %v1510 = vadd.f32 %v684, %v1508
          %1511 = vst [vmem:[#allocation2] sm:$0xff] %v1509
          %1512 = vst [vmem:[#allocation2 + $0x8] sm:$0xff] %v1510
          %v1513 = vld [vmem:[#allocation16] sm:$0x1]
          %v1514 = vld [vmem:[#allocation17] sm:$0x1]
          %1515 = vadd.xlane.f32.xlu0 %v1509
          %v1516 = vpop.xlane.xlu0 %1515
          %1517 = vadd.xlane.f32.xlu0 %v1510
          %v1518 = vpop.xlane.xlu0 %1517
          %v1519 = vmul.f32 %v1516, %v697
          %v1520 = vmul.f32 %v1518, %v697
          %v1521 = vsub.f32 %v1509, %v1519
          %v1522 = vsub.f32 %v1510, %v1520
          %v1523 = vmul.f32 %v1521, %v1521
          %v1524 = vmul.f32 %v1522, %v1522
          %1525 = vadd.xlane.f32.xlu0 %v1523
          %v1526 = vpop.xlane.xlu0 %1525
          %1527 = vadd.xlane.f32.xlu0 %v1524
          %v1528 = vpop.xlane.xlu0 %1527
          %v1529 = vmul.f32 %v1526, %v697
          %v1530 = vmul.f32 %v1528, %v697
          %v1531 = vadd.f32 %v1529, 1e-05
          %v1532 = vadd.f32 %v1530, 1e-05
          %v1533 = vrsqrt.pop %v1531
          %v1534 = vmul.f32 %v1533, %v1531
          %v1535 = vmul.f32 %v1534, %v1533
          %v1536 = vmul.f32 0.5, %v1535
          %v1537 = vsub.f32 1.5, %v1536
          %v1538 = vmul.f32 %v1533, %v1537
          %vm1539 = vweird.f32 %v1531
          %vm1540 = vweird.f32 %v1533
          %vm1541 = vmor %vm1539, %vm1540
          %v1542 = vsel %vm1541, %v1533, %v1538
          %v1543 = vrsqrt.pop %v1532
          %v1544 = vmul.f32 %v1543, %v1532
          %v1545 = vmul.f32 %v1544, %v1543
          %v1546 = vmul.f32 0.5, %v1545
          %v1547 = vsub.f32 1.5, %v1546
          %v1548 = vmul.f32 %v1543, %v1547
          %vm1549 = vweird.f32 %v1532
          %vm1550 = vweird.f32 %v1543
          %vm1551 = vmor %vm1549, %vm1550
          %v1552 = vsel %vm1551, %v1543, %v1548
          %v1553 = vmul.f32 %v1521, %v1542
          %v1554 = vmul.f32 %v1522, %v1552
          %v1556 = vperm.slane %v1513, 0
          %v1558 = vmul.f32 %v1553, %v1556
          %v1559 = vmul.f32 %v1554, %v1556
          %v1561 = vperm.slane %v1514, 0
          %v1563 = vadd.f32 %v1558, %v1561
          %v1564 = vadd.f32 %v1559, %v1561
          %v1565 = vpack.c.bf16 %v1563, %v1563
          %v1566 = vpack.c.bf16 %v1564, %v1564
          %1567 = vst [vmem:[#allocation3] sm:$0xf] %v1565
          %1568 = vst [vmem:[#allocation3 + $0x4] sm:$0xf] %v1566
          %1569 = vst [vmem:[#allocation4] sm:$0xff] 0.0
          %1570 = vst [vmem:[#allocation4 + $0x8] sm:$0xff] 0.0
        $region116: #{tpu_custom_call.1} parent=71 // pred_fallthru
          _
        %v1571 = vld [vmem:[#allocation3] sm:$0xf]
        %v1572 = vld [vmem:[#allocation3 + $0x4] sm:$0xf]
        %v1573 = vld [vmem:[%s603] sm:$0xff]
        %v1574 = vld [vmem:[%s603 + $0x8] sm:$0xff]
        %v1575 = vld [vmem:[%s603 + $0x10] sm:$0xff]
        %v1576 = vld [vmem:[%s603 + $0x18] sm:$0xff]
        %v1577 = vld [vmem:[%s603 + $0x20] sm:$0xff]
        %v1578 = vld [vmem:[%s603 + $0x28] sm:$0xff]
        %v1579 = vld [vmem:[%s603 + $0x30] sm:$0xff]
        %v1580 = vld [vmem:[%s603 + $0x38] sm:$0xff]
        %v1581 = vld [vmem:[%s603 + $0x40] sm:$0xff]
        %v1582 = vld [vmem:[%s603 + $0x48] sm:$0xff]
        %v1583 = vld [vmem:[%s603 + $0x50] sm:$0xff]
        %v1584 = vld [vmem:[%s603 + $0x58] sm:$0xff]
        %v1585 = vld [vmem:[%s603 + $0x60] sm:$0xff]
        %v1586 = vld [vmem:[%s603 + $0x68] sm:$0xff]
        %v1587 = vld [vmem:[%s603 + $0x70] sm:$0xff]
        %v1588 = vld [vmem:[%s603 + $0x78] sm:$0xff]
        %v1589 = vld [vmem:[%s675] sm:$0x3]
        %v1591 = vperm.slane %v1589, 0
        %v1592 = vperm.slane %v1589, 1
        %v1597 = vunpack.c.l.b16 %v1571
        %v1598 = vunpack.c.l.b16 %v1572
        %v1599 = vpack.c.b16 %v1598, %v1597
        %v1617 = vunpack.c.l.b16 %v1573
        %v1618 = vunpack.c.h.b16 %v1573
        %v1619 = vunpack.c.l.b16 %v1574
        %v1620 = vunpack.c.h.b16 %v1574
        %v1621 = vunpack.c.l.b16 %v1575
        %v1622 = vunpack.c.h.b16 %v1575
        %v1623 = vunpack.c.l.b16 %v1576
        %v1624 = vunpack.c.h.b16 %v1576
        %v1625 = vunpack.c.l.b16 %v1577
        %v1626 = vunpack.c.h.b16 %v1577
        %v1627 = vunpack.c.l.b16 %v1578
        %v1628 = vunpack.c.h.b16 %v1578
        %v1629 = vunpack.c.l.b16 %v1579
        %v1630 = vunpack.c.h.b16 %v1579
        %v1631 = vunpack.c.l.b16 %v1580
        %v1632 = vunpack.c.h.b16 %v1580
        %v1633 = vunpack.c.l.b16 %v1581
        %v1634 = vunpack.c.h.b16 %v1581
        %v1635 = vunpack.c.l.b16 %v1582
        %v1636 = vunpack.c.h.b16 %v1582
        %v1637 = vunpack.c.l.b16 %v1583
        %v1638 = vunpack.c.h.b16 %v1583
        %v1639 = vunpack.c.l.b16 %v1584
        %v1640 = vunpack.c.h.b16 %v1584
        %v1641 = vunpack.c.l.b16 %v1585
        %v1642 = vunpack.c.h.b16 %v1585
        %v1643 = vunpack.c.l.b16 %v1586
        %v1644 = vunpack.c.h.b16 %v1586
        %v1645 = vunpack.c.l.b16 %v1587
        %v1646 = vunpack.c.h.b16 %v1587
        %v1647 = vunpack.c.l.b16 %v1588
        %v1648 = vunpack.c.h.b16 %v1588
        %v1649 = vpack.c.b16 %v1619, %v1617
        %v1650 = vpack.c.b16 %v1620, %v1618
        %v1651 = vpack.c.b16 %v1623, %v1621
        %v1652 = vpack.c.b16 %v1624, %v1622
        %v1653 = vpack.c.b16 %v1627, %v1625
        %v1654 = vpack.c.b16 %v1628, %v1626
        %v1655 = vpack.c.b16 %v1631, %v1629
        %v1656 = vpack.c.b16 %v1632, %v1630
        %v1657 = vpack.c.b16 %v1635, %v1633
        %v1658 = vpack.c.b16 %v1636, %v1634
        %v1659 = vpack.c.b16 %v1639, %v1637
        %v1660 = vpack.c.b16 %v1640, %v1638
        %v1661 = vpack.c.b16 %v1643, %v1641
        %v1662 = vpack.c.b16 %v1644, %v1642
        %v1663 = vpack.c.b16 %v1647, %v1645
        %v1664 = vpack.c.b16 %v1648, %v1646
        %1681 = vmatpush.bf16.msra.mxu0 %v1663
        %1682 = vmatpush.bf16.msra.mxu0 %v1661
        %1683 = vmatpush.bf16.msra.mxu0 %v1659
        %1684 = vmatpush.bf16.msra.mxu0 %v1657
        %1685 = vmatpush.bf16.msra.mxu0 %v1655
        %1686 = vmatpush.bf16.msra.mxu0 %v1653
        %1687 = vmatpush.bf16.msra.mxu0 %v1651
        %1688 = vmatpush.bf16.msra.mxu0 %v1649
        %1689 = vmatmul.bf16.gmra.mxu0 %v1599
        %v1690 = vpop.f32.mrf.mxu0
        %v1691 = vadd.f32 %v1591, %v1690
        %v1692 = vpop.f32.mrf.mxu0
        %v1693 = vadd.f32 %v1591, %v1692
        %1694 = vdwg.mxu0
        %1695 = vmatpush.bf16.msra.mxu0 %v1664
        %1696 = vmatpush.bf16.msra.mxu0 %v1662
        %1697 = vmatpush.bf16.msra.mxu0 %v1660
        %1698 = vmatpush.bf16.msra.mxu0 %v1658
        %1699 = vmatpush.bf16.msra.mxu0 %v1656
        %1700 = vmatpush.bf16.msra.mxu0 %v1654
        %1701 = vmatpush.bf16.msra.mxu0 %v1652
        %1702 = vmatpush.bf16.msra.mxu0 %v1650
        %1703 = vmatmul.bf16.gmra.mxu0 %v1599
        %v1704 = vpop.f32.mrf.mxu0
        %v1705 = vadd.f32 %v1592, %v1704
        %v1706 = vpop.f32.mrf.mxu0
        %v1707 = vadd.f32 %v1592, %v1706
        %1708 = vdwg.mxu0
        %v1709 = vmul.f32 %v1691, 0.5
        %v1710 = vmul.f32 %v1705, 0.5
        %v1711 = vmul.f32 %v1693, 0.5
        %v1712 = vmul.f32 %v1707, 0.5
        %v1713 = vmul.f32 %v1691, 0.70710677
        %v1714 = vmul.f32 %v1705, 0.70710677
        %v1715 = vmul.f32 %v1693, 0.70710677
        %v1716 = vmul.f32 %v1707, 0.70710677
        %v1717 = vmul.f32 %v1713, %v1713
        %v1718 = vmin.f32 16.0, %v1717
        %v1719 = vmul.f32 %v1718, 2.1237322e-06
        %v1720 = vadd.f32 %v1719, 0.00028619796
        %v1721 = vmul.f32 %v1718, %v1720
        %v1722 = vadd.f32 %v1721, 0.0036580483
        %v1723 = vmul.f32 %v1718, %v1722
        %v1724 = vadd.f32 %v1723, 0.05243302
        %v1725 = vmul.f32 %v1718, %v1724
        %v1726 = vadd.f32 %v1725, 0.18741608
        %v1727 = vmul.f32 %v1718, %v1726
        %v1728 = vadd.f32 %v1727, 1.1283791
        %v1729 = vmul.f32 %v1713, %v1728
        %v1730 = vmul.f32 %v1718, 3.8918573e-05
        %v1731 = vadd.f32 %v1730, 0.001143296
        %v1732 = vmul.f32 %v1718, %v1731
        %v1733 = vadd.f32 %v1732, 0.014752088
        %v1734 = vmul.f32 %v1718, %v1733
        %v1735 = vadd.f32 %v1734, 0.112945676
        %v1736 = vmul.f32 %v1718, %v1735
        %v1737 = vadd.f32 %v1736, 0.4994258
        %v1738 = vmul.f32 %v1718, %v1737
        %v1739 = vadd.f32 %v1738, 1.0
        %v1740 = vrcp.pop %v1739
        %v1741 = vmul.f32 %v1739, %v1740
        %v1742 = vsub.f32 1.0, %v1741
        %v1743 = vmul.f32 %v1740, %v1742
        %v1744 = vadd.f32 %v1740, %v1743
        %vm1745 = vweird.f32 %v1739
        %vm1746 = vweird.f32 %v1740
        %vm1747 = vmor %vm1745, %vm1746
        %v1748 = vsel %vm1747, %v1740, %v1744
        %v1749 = vand.u32 2147483647, %v1739
        %vm1750 = vcmp.eq.f32.partialorder %v1749, 8.507059e+37
        %v1751 = vand.u32 %v1739, 2147483648
        %v1752 = vor.u32 1.1754944e-38, %v1751
        %v1753 = vsel %vm1750, %v1752, %v1748
        %v1754 = vmul.f32 %v1729, %v1753
        %v1755 = vmin.f32 %v1754, 1.0
        %v1756 = vmax.f32 %v1755, -1.0
        %v1757 = vmul.f32 %v1714, %v1714
        %v1758 = vmin.f32 16.0, %v1757
        %v1759 = vmul.f32 %v1758, 2.1237322e-06
        %v1760 = vadd.f32 %v1759, 0.00028619796
        %v1761 = vmul.f32 %v1758, %v1760
        %v1762 = vadd.f32 %v1761, 0.0036580483
        %v1763 = vmul.f32 %v1758, %v1762
        %v1764 = vadd.f32 %v1763, 0.05243302
        %v1765 = vmul.f32 %v1758, %v1764
        %v1766 = vadd.f32 %v1765, 0.18741608
        %v1767 = vmul.f32 %v1758, %v1766
        %v1768 = vadd.f32 %v1767, 1.1283791
        %v1769 = vmul.f32 %v1714, %v1768
        %v1770 = vmul.f32 %v1758, 3.8918573e-05
        %v1771 = vadd.f32 %v1770, 0.001143296
        %v1772 = vmul.f32 %v1758, %v1771
        %v1773 = vadd.f32 %v1772, 0.014752088
        %v1774 = vmul.f32 %v1758, %v1773
        %v1775 = vadd.f32 %v1774, 0.112945676
        %v1776 = vmul.f32 %v1758, %v1775
        %v1777 = vadd.f32 %v1776, 0.4994258
        %v1778 = vmul.f32 %v1758, %v1777
        %v1779 = vadd.f32 %v1778, 1.0
        %v1780 = vrcp.pop %v1779
        %v1781 = vmul.f32 %v1779, %v1780
        %v1782 = vsub.f32 1.0, %v1781
        %v1783 = vmul.f32 %v1780, %v1782
        %v1784 = vadd.f32 %v1780, %v1783
        %vm1785 = vweird.f32 %v1779
        %vm1786 = vweird.f32 %v1780
        %vm1787 = vmor %vm1785, %vm1786
        %v1788 = vsel %vm1787, %v1780, %v1784
        %v1789 = vand.u32 2147483647, %v1779
        %vm1790 = vcmp.eq.f32.partialorder %v1789, 8.507059e+37
        %v1791 = vand.u32 %v1779, 2147483648
        %v1792 = vor.u32 1.1754944e-38, %v1791
        %v1793 = vsel %vm1790, %v1792, %v1788
        %v1794 = vmul.f32 %v1769, %v1793
        %v1795 = vmin.f32 %v1794, 1.0
        %v1796 = vmax.f32 %v1795, -1.0
        %v1797 = vmul.f32 %v1715, %v1715
        %v1798 = vmin.f32 16.0, %v1797
        %v1799 = vmul.f32 %v1798, 2.1237322e-06
        %v1800 = vadd.f32 %v1799, 0.00028619796
        %v1801 = vmul.f32 %v1798, %v1800
        %v1802 = vadd.f32 %v1801, 0.0036580483
        %v1803 = vmul.f32 %v1798, %v1802
        %v1804 = vadd.f32 %v1803, 0.05243302
        %v1805 = vmul.f32 %v1798, %v1804
        %v1806 = vadd.f32 %v1805, 0.18741608
        %v1807 = vmul.f32 %v1798, %v1806
        %v1808 = vadd.f32 %v1807, 1.1283791
        %v1809 = vmul.f32 %v1715, %v1808
        %v1810 = vmul.f32 %v1798, 3.8918573e-05
        %v1811 = vadd.f32 %v1810, 0.001143296
        %v1812 = vmul.f32 %v1798, %v1811
        %v1813 = vadd.f32 %v1812, 0.014752088
        %v1814 = vmul.f32 %v1798, %v1813
        %v1815 = vadd.f32 %v1814, 0.112945676
        %v1816 = vmul.f32 %v1798, %v1815
        %v1817 = vadd.f32 %v1816, 0.4994258
        %v1818 = vmul.f32 %v1798, %v1817
        %v1819 = vadd.f32 %v1818, 1.0
        %v1820 = vrcp.pop %v1819
        %v1821 = vmul.f32 %v1819, %v1820
        %v1822 = vsub.f32 1.0, %v1821
        %v1823 = vmul.f32 %v1820, %v1822
        %v1824 = vadd.f32 %v1820, %v1823
        %vm1825 = vweird.f32 %v1819
        %vm1826 = vweird.f32 %v1820
        %vm1827 = vmor %vm1825, %vm1826
        %v1828 = vsel %vm1827, %v1820, %v1824
        %v1829 = vand.u32 2147483647, %v1819
        %vm1830 = vcmp.eq.f32.partialorder %v1829, 8.507059e+37
        %v1831 = vand.u32 %v1819, 2147483648
        %v1832 = vor.u32 1.1754944e-38, %v1831
        %v1833 = vsel %vm1830, %v1832, %v1828
        %v1834 = vmul.f32 %v1809, %v1833
        %v1835 = vmin.f32 %v1834, 1.0
        %v1836 = vmax.f32 %v1835, -1.0
        %v1837 = vmul.f32 %v1716, %v1716
        %v1838 = vmin.f32 16.0, %v1837
        %v1839 = vmul.f32 %v1838, 2.1237322e-06
        %v1840 = vadd.f32 %v1839, 0.00028619796
        %v1841 = vmul.f32 %v1838, %v1840
        %v1842 = vadd.f32 %v1841, 0.0036580483
        %v1843 = vmul.f32 %v1838, %v1842
        %v1844 = vadd.f32 %v1843, 0.05243302
        %v1845 = vmul.f32 %v1838, %v1844
        %v1846 = vadd.f32 %v1845, 0.18741608
        %v1847 = vmul.f32 %v1838, %v1846
        %v1848 = vadd.f32 %v1847, 1.1283791
        %v1849 = vmul.f32 %v1716, %v1848
        %v1850 = vmul.f32 %v1838, 3.8918573e-05
        %v1851 = vadd.f32 %v1850, 0.001143296
        %v1852 = vmul.f32 %v1838, %v1851
        %v1853 = vadd.f32 %v1852, 0.014752088
        %v1854 = vmul.f32 %v1838, %v1853
        %v1855 = vadd.f32 %v1854, 0.112945676
        %v1856 = vmul.f32 %v1838, %v1855
        %v1857 = vadd.f32 %v1856, 0.4994258
        %v1858 = vmul.f32 %v1838, %v1857
        %v1859 = vadd.f32 %v1858, 1.0
        %v1860 = vrcp.pop %v1859
        %v1861 = vmul.f32 %v1859, %v1860
        %v1862 = vsub.f32 1.0, %v1861
        %v1863 = vmul.f32 %v1860, %v1862
        %v1864 = vadd.f32 %v1860, %v1863
        %vm1865 = vweird.f32 %v1859
        %vm1866 = vweird.f32 %v1860
        %vm1867 = vmor %vm1865, %vm1866
        %v1868 = vsel %vm1867, %v1860, %v1864
        %v1869 = vand.u32 2147483647, %v1859
        %vm1870 = vcmp.eq.f32.partialorder %v1869, 8.507059e+37
        %v1871 = vand.u32 %v1859, 2147483648
        %v1872 = vor.u32 1.1754944e-38, %v1871
        %v1873 = vsel %vm1870, %v1872, %v1868
        %v1874 = vmul.f32 %v1849, %v1873
        %v1875 = vmin.f32 %v1874, 1.0
        %v1876 = vmax.f32 %v1875, -1.0
        %v1877 = vadd.f32 %v1756, 1.0
        %v1878 = vadd.f32 %v1796, 1.0
        %v1879 = vadd.f32 %v1836, 1.0
        %v1880 = vadd.f32 %v1876, 1.0
        %v1881 = vmul.f32 %v1709, %v1877
        %v1882 = vmul.f32 %v1710, %v1878
        %v1883 = vmul.f32 %v1711, %v1879
        %v1884 = vmul.f32 %v1712, %v1880
        %v1885 = vld [vmem:[#allocation4] sm:$0xff]
        %v1886 = vld [vmem:[#allocation4 + $0x8] sm:$0xff]
        %v1887 = vpack.c.bf16 %v1883, %v1881
        %v1888 = vpack.c.bf16 %v1884, %v1882
        %v1889 = vld [vmem:[%s613] sm:$0xf]
        %v1890 = vld [vmem:[%s613 + $0x4] sm:$0xf]
        %v1891 = vld [vmem:[%s613 + $0x8] sm:$0xf]
        %v1892 = vld [vmem:[%s613 + $0xc] sm:$0xf]
        %v1893 = vld [vmem:[%s613 + $0x10] sm:$0xf]
        %v1894 = vld [vmem:[%s613 + $0x14] sm:$0xf]
        %v1895 = vld [vmem:[%s613 + $0x18] sm:$0xf]
        %v1896 = vld [vmem:[%s613 + $0x1c] sm:$0xf]
        %v1897 = vld [vmem:[%s613 + $0x20] sm:$0xf]
        %v1898 = vld [vmem:[%s613 + $0x24] sm:$0xf]
        %v1899 = vld [vmem:[%s613 + $0x28] sm:$0xf]
        %v1900 = vld [vmem:[%s613 + $0x2c] sm:$0xf]
        %v1901 = vld [vmem:[%s613 + $0x30] sm:$0xf]
        %v1902 = vld [vmem:[%s613 + $0x34] sm:$0xf]
        %v1903 = vld [vmem:[%s613 + $0x38] sm:$0xf]
        %v1904 = vld [vmem:[%s613 + $0x3c] sm:$0xf]
        %v1905 = vld [vmem:[%s613 + $0x40] sm:$0xf]
        %v1906 = vld [vmem:[%s613 + $0x44] sm:$0xf]
        %v1907 = vld [vmem:[%s613 + $0x48] sm:$0xf]
        %v1908 = vld [vmem:[%s613 + $0x4c] sm:$0xf]
        %v1909 = vld [vmem:[%s613 + $0x50] sm:$0xf]
        %v1910 = vld [vmem:[%s613 + $0x54] sm:$0xf]
        %v1911 = vld [vmem:[%s613 + $0x58] sm:$0xf]
        %v1912 = vld [vmem:[%s613 + $0x5c] sm:$0xf]
        %v1913 = vld [vmem:[%s613 + $0x60] sm:$0xf]
        %v1914 = vld [vmem:[%s613 + $0x64] sm:$0xf]
        %v1915 = vld [vmem:[%s613 + $0x68] sm:$0xf]
        %v1916 = vld [vmem:[%s613 + $0x6c] sm:$0xf]
        %v1917 = vld [vmem:[%s613 + $0x70] sm:$0xf]
        %v1918 = vld [vmem:[%s613 + $0x74] sm:$0xf]
        %v1919 = vld [vmem:[%s613 + $0x78] sm:$0xf]
        %v1920 = vld [vmem:[%s613 + $0x7c] sm:$0xf]
        %v1953 = vunpack.c.l.b16 %v1889
        %v1954 = vunpack.c.l.b16 %v1890
        %v1955 = vunpack.c.l.b16 %v1891
        %v1956 = vunpack.c.l.b16 %v1892
        %v1957 = vunpack.c.l.b16 %v1893
        %v1958 = vunpack.c.l.b16 %v1894
        %v1959 = vunpack.c.l.b16 %v1895
        %v1960 = vunpack.c.l.b16 %v1896
        %v1961 = vunpack.c.l.b16 %v1897
        %v1962 = vunpack.c.l.b16 %v1898
        %v1963 = vunpack.c.l.b16 %v1899
        %v1964 = vunpack.c.l.b16 %v1900
        %v1965 = vunpack.c.l.b16 %v1901
        %v1966 = vunpack.c.l.b16 %v1902
        %v1967 = vunpack.c.l.b16 %v1903
        %v1968 = vunpack.c.l.b16 %v1904
        %v1969 = vunpack.c.l.b16 %v1905
        %v1970 = vunpack.c.l.b16 %v1906
        %v1971 = vunpack.c.l.b16 %v1907
        %v1972 = vunpack.c.l.b16 %v1908
        %v1973 = vunpack.c.l.b16 %v1909
        %v1974 = vunpack.c.l.b16 %v1910
        %v1975 = vunpack.c.l.b16 %v1911
        %v1976 = vunpack.c.l.b16 %v1912
        %v1977 = vunpack.c.l.b16 %v1913
        %v1978 = vunpack.c.l.b16 %v1914
        %v1979 = vunpack.c.l.b16 %v1915
        %v1980 = vunpack.c.l.b16 %v1916
        %v1981 = vunpack.c.l.b16 %v1917
        %v1982 = vunpack.c.l.b16 %v1918
        %v1983 = vunpack.c.l.b16 %v1919
        %v1984 = vunpack.c.l.b16 %v1920
        %v1985 = vpack.c.b16 %v1954, %v1953
        %v1986 = vpack.c.b16 %v1956, %v1955
        %v1987 = vpack.c.b16 %v1958, %v1957
        %v1988 = vpack.c.b16 %v1960, %v1959
        %v1989 = vpack.c.b16 %v1962, %v1961
        %v1990 = vpack.c.b16 %v1964, %v1963
        %v1991 = vpack.c.b16 %v1966, %v1965
        %v1992 = vpack.c.b16 %v1968, %v1967
        %v1993 = vpack.c.b16 %v1970, %v1969
        %v1994 = vpack.c.b16 %v1972, %v1971
        %v1995 = vpack.c.b16 %v1974, %v1973
        %v1996 = vpack.c.b16 %v1976, %v1975
        %v1997 = vpack.c.b16 %v1978, %v1977
        %v1998 = vpack.c.b16 %v1980, %v1979
        %v1999 = vpack.c.b16 %v1982, %v1981
        %v2000 = vpack.c.b16 %v1984, %v1983
        %2017 = vmatpush.bf16.msra.mxu0 %v1992
        %2018 = vmatpush.bf16.msra.mxu0 %v1991
        %2019 = vmatpush.bf16.msra.mxu0 %v1990
        %2020 = vmatpush.bf16.msra.mxu0 %v1989
        %2021 = vmatpush.bf16.msra.mxu0 %v1988
        %2022 = vmatpush.bf16.msra.mxu0 %v1987
        %2023 = vmatpush.bf16.msra.mxu0 %v1986
        %2024 = vmatpush.bf16.msra.mxu0 %v1985
        %2025 = vmatmul.bf16.gmra.mxu0 %v1887
        %v2026 = vpop.f32.mrf.mxu0
        %v2027 = vadd.f32 0.0, %v2026
        %v2028 = vpop.f32.mrf.mxu0
        %v2029 = vadd.f32 0.0, %v2028
        %2030 = vdwg.mxu0
        %2031 = vmatpush.bf16.msra.mxu0 %v2000
        %2032 = vmatpush.bf16.msra.mxu0 %v1999
        %2033 = vmatpush.bf16.msra.mxu0 %v1998
        %2034 = vmatpush.bf16.msra.mxu0 %v1997
        %2035 = vmatpush.bf16.msra.mxu0 %v1996
        %2036 = vmatpush.bf16.msra.mxu0 %v1995
        %2037 = vmatpush.bf16.msra.mxu0 %v1994
        %2038 = vmatpush.bf16.msra.mxu0 %v1993
        %2039 = vmatmul.bf16.gmra.mxu0 %v1888
        %v2040 = vpop.f32.mrf.mxu0
        %v2041 = vadd.f32 %v2027, %v2040
        %v2042 = vpop.f32.mrf.mxu0
        %v2043 = vadd.f32 %v2029, %v2042
        %2044 = vdwg.mxu0
        %v2045 = vadd.f32 %v1885, %v2041
        %v2046 = vadd.f32 %v1886, %v2043
        %2047 = vst [vmem:[#allocation4] sm:$0xff] %v2045
        %2048 = vst [vmem:[#allocation4 + $0x8] sm:$0xff] %v2046
        %p2049 = scmp.eq.s32.totalorder %s39, 1
        // Predicated region
        $region117: #{tpu_custom_call.1} parent=71 // pred_check
          %p2050 = pneg %p2049
        $region118: #{tpu_custom_call.1} parent=71 // pred_check_branch
          %2052 = sbr.rel (%p2050) target = $region120
        $region119: #{tpu_custom_call.1} parent=71 // pred_region
          %v2053 = vld [vmem:[#allocation2] sm:$0xff]
          %v2054 = vld [vmem:[#allocation2 + $0x8] sm:$0xff]
          %v2055 = vld [vmem:[#allocation4] sm:$0xff]
          %v2056 = vld [vmem:[#allocation4 + $0x8] sm:$0xff]
          %v2057 = vadd.f32 %v2053, %v2055
          %v2058 = vadd.f32 %v2054, %v2056
          %v2059 = vld [vmem:[%s12] sm:$0x1]
          %v2061 = vperm.slane %v2059, 0
          %v2063 = vadd.f32 %v2057, %v2061
          %v2064 = vadd.f32 %v2058, %v2061
          %2065 = vst [vmem:[%s670] sm:$0xff] %v2063
          %2066 = vst [vmem:[%s670 + $0x8] sm:$0xff] %v2064
        $region120: #{tpu_custom_call.1} parent=71 // pred_fallthru
          _
        %s2067 = sand.u32 %s347, 1
        %s2068 = scalar_lea.sflag [#allocation7], %s2067
        %s2069 = sand.u32 %s347, 1
        %s2070 = smul.addr %s2069, 16
        %s2071 = scalar_lea.vmem [#allocation21], %s2070
        // Predicated region
        $region121: #{tpu_custom_call.1} parent=71 // pred_check
          %p2072 = pneg %p357
        $region122: #{tpu_custom_call.1} parent=71 // pred_check_branch
          %2074 = sbr.rel (%p2072) target = $region124
        $region123: #{tpu_custom_call.1} parent=71 // pred_region
          %2076 = vsyncadd %s2068, 0
          %s2077 = smul.addr %s38, 2
          %s2078 = smul.addr %s2077, 8
          %s2079 = scalar_lea.hbm %s13, %s2078
          %s2080 = sshll.u32 %s2071, 4
          %s2081 = int_to_ptr.vmem [resolvable:$true] %s2080
          %s2082 = sshll.u32 %s2079, 4
          %s2083 = int_to_ptr.hbm [resolvable:$true] %s2082
          %2088 = dma.vmem_to_hbm [thread:$0]  %s2081, 256, %s2083, %s2068, 128, 128, 8
        $region124: #{tpu_custom_call.1} parent=71 // pred_fallthru
          _
      $region72: #{tpu_custom_call.1} parent=5 // pred_fallthru
        _
      %p2089 = scmp.le.s32.totalorder 2, %s29
      // Predicated region
      $region125: #{tpu_custom_call.1} parent=5 // pred_check
        %p2090 = pneg %p2089
      $region126: #{tpu_custom_call.1} parent=5 // pred_check_branch
        %2092 = sbr.rel (%p2090) target = $region128
      $region127: #{tpu_custom_call.1} parent=5 // pred_region
        %s2093 = ssub.s32 %s29, 2
        // Predicated region
        $region129: #{tpu_custom_call.1} parent=127 // pred_check
          %p2094 = pneg %p363
        $region130: #{tpu_custom_call.1} parent=127 // pred_check_branch
          %2096 = sbr.rel (%p2094) target = $region132
        $region131: #{tpu_custom_call.1} parent=127 // pred_region
          %s2097 = sand.u32 %s348, 1
          %s2098 = scalar_lea.sflag [#allocation7], %s2097
          %s2099 = sand.u32 %s348, 1
          %s2100 = smul.addr %s2099, 16
          %s2101 = scalar_lea.vmem [#allocation21], %s2100
          %2103 = dma.done %s2098, 256
        $region132: #{tpu_custom_call.1} parent=127 // pred_fallthru
          _
      $region128: #{tpu_custom_call.1} parent=5 // pred_fallthru
        _
    $region6: #{tpu_custom_call.1} parent=1 // loop_footer
      %s33 = sadd.s32 1, %s29
    $region7: #{tpu_custom_call.1} parent=1 // loop_footer_branch
      %28 = sbr.rel target = $region3
    $region8: #{tpu_custom_call.1} parent=1 // loop_exit
      _
    %2104 = vsyncpa [#allocation6], 1
    %s2105 = scalar_lea.sflag [#allocation6], 1
    %2106 = vsyncpa %s2105, 1
    %2107 = vsyncpa [#allocation9], 1
    %2108 = vsyncpa [#allocation12], 1
    %2109 = vsyncpa [#allocation15], 1
    %2110 = vsyncpa [#allocation18], 1
    %2111 = vsyncpa [#allocation7], 1
    %s2112 = scalar_lea.sflag [#allocation7], 1
    %2113 = vsyncpa %s2112, 1

</llo_original>
